<compile_context>
chip_gen: v5e
topology: v5e:2x2
jax: 0.10.0
libtpu: 0.0.40
codegen_flags: <defaults>
</compile_context>

<pallas_src>
import jax
import jax.numpy as jnp
import numpy as np
from jax import lax
from jax.experimental import pallas as pl
from jax.experimental.pallas import tpu as pltpu


# ------------------------------ kernel ------------------------------------

def _shift_rows(x, d, row_idx):
    """s[y] = x[y + d] with zeros outside [0, H).  d is a static +-1."""
    H = x.shape[0]
    r = pltpu.roll(x, shift=(-d) % H, axis=0)        # sublane rotate (XLU slot)
    if d > 0:
        return jnp.where(row_idx < H - d, r, 0.0)
    return jnp.where(row_idx >= -d, r, 0.0)


def _conv3x3(x, wm_ref, b_ref, row_idx):
    """3x3 conv, stride 1, pad 1, on a lane-dense (H, W*C) tile.

    wm_ref: (3*W*C, W*Cout) banded weight matrix (dy-major rows).
    b_ref:  (1, W*Cout) per-pixel-tiled bias.
    """
    up = _shift_rows(x, -1, row_idx)                  # x[y-1]
    dn = _shift_rows(x, +1, row_idx)                  # x[y+1]
    patches = jnp.concatenate([up, x, dn], axis=1)    # (H, 3*W*C)
    y = jnp.dot(patches, wm_ref[...], preferred_element_type=jnp.float32)
    return y + b_ref[...]


def _rcu(x, w1_ref, b1_ref, w2_ref, b2_ref, row_idx):
    """ResidualConvUnit (bn=False, activation=ReLU) on a (H, W*C) tile."""
    out = jnp.maximum(x, 0.0)
    out = _conv3x3(out, w1_ref, b1_ref, row_idx)
    out = jnp.maximum(out, 0.0)
    out = _conv3x3(out, w2_ref, b2_ref, row_idx)
    return out + x


def ffb_kernel(x0_ref, x1_ref,
               w1a_ref, b1a_ref, w2a_ref, b2a_ref,    # resConfUnit1
               w1b_ref, b1b_ref, w2b_ref, b2b_ref,    # resConfUnit2
               wa_ref, bo_ref,                        # fused 1x1 out_conv + W-interp
               ah_ref,                                # H-interp rows
               o_ref):
    x0 = x0_ref[0]                                    # (H, W*C)
    x1 = x1_ref[0]
    H, WC = x0.shape
    row_idx = lax.broadcasted_iota(jnp.int32, (H, WC), 0)

    # output = xs[0] + resConfUnit1(xs[1]);  output = resConfUnit2(output)
    out = x0 + _rcu(x1, w1a_ref, b1a_ref, w2a_ref, b2a_ref, row_idx)
    out = _rcu(out, w1b_ref, b1b_ref, w2b_ref, b2b_ref, row_idx)

    # Bilinear x2 (align_corners=True) + 1x1 out_conv, transpose-free:
    #   wa already contains (W-interp) ∘ (1x1 conv) -- they commute because the
    #   interpolation rows sum to 1;  ah is the H-interp row matrix.
    z = jnp.dot(out, wa_ref[...], preferred_element_type=jnp.float32)   # (H,  W2*Cout)
    y = jnp.dot(ah_ref[...], z, preferred_element_type=jnp.float32)     # (H2, W2*Cout)
    o_ref[0] = (y + bo_ref[...]).astype(o_ref.dtype)


# ------------------------- wrapper / preprocessing --------------------------

def _interp_matrix(out_size, in_size):
    """Row-interpolation matrix for bilinear resize with align_corners=True."""
    if in_size == 1:
        return jnp.ones((out_size, 1), jnp.float32)
    src = jnp.arange(out_size, dtype=jnp.float32) * (in_size - 1) / (out_size - 1)
    lo = jnp.clip(jnp.floor(src).astype(jnp.int32), 0, in_size - 2)
    frac = src - lo.astype(jnp.float32)
    rows = jnp.arange(out_size)
    a = jnp.zeros((out_size, in_size), jnp.float32)
    a = a.at[rows, lo].add(1.0 - frac)
    a = a.at[rows, lo + 1].add(frac)
    return a


def _band_conv_weight(w, W):
    """(3,3,Cin,Cout) HWIO conv weight -> banded (3*W*Cin, W*Cout) matrix.

    Row index = dy*(W*Cin) + xi*Cin + c ; col index = x*Cout + co ;
    entry = w[dy, xi-x+1, c, co] for xi-x in {-1,0,1}, else 0 (zero padding
    at the W boundaries falls out of the band structure automatically).
    """
    _, _, C, Cout = w.shape
    xi = jnp.arange(W)[:, None]
    xo = jnp.arange(W)[None, :]
    dx = xi - xo + 1                                   # (W, W)
    valid = ((dx >= 0) & (dx <= 2)).astype(w.dtype)
    blk = w[:, jnp.clip(dx, 0, 2)]                     # (3, W, W, C, Cout)
    blk = blk * valid[None, :, :, None, None]
    blk = jnp.transpose(blk, (0, 1, 3, 2, 4))          # (3, xi, c, x, co)
    return blk.reshape(3 * W * C, W * Cout)


def _upsample_conv_matrix(wo, aw):
    """Fold 1x1 conv (C,Cout) into the W-interp rows (W2,W) -> (W*C, W2*Cout)."""
    C, Cout = wo.shape
    W2, W = aw.shape
    m = jnp.einsum("px,cd->xcpd", aw, wo)              # m[x,c,p,d] = aw[p,x]*wo[c,d]
    return m.reshape(W * C, W2 * Cout)


def feature_fusion_block(x0, x1, params):
    """x0, x1: (N, H, W, C) f32  ->  (N, 2H, 2W, Cout) f32."""
    N, H, W, C = x0.shape
    H2, W2 = 2 * H, 2 * W
    Cout = params["wo"].shape[-1]
    WC, WC2 = W * C, W2 * Cout

    ah = _interp_matrix(H2, H)                         # (H2, H)
    aw = _interp_matrix(W2, W)                         # (W2, W)

    # lane-dense activations: (N, H, W*C)
    x0f = x0.reshape(N, H, WC)
    x1f = x1.reshape(N, H, WC)

    # one-time host-side weight restructuring
    wm1a = _band_conv_weight(params["w1a"], W)
    wm2a = _band_conv_weight(params["w2a"], W)
    wm1b = _band_conv_weight(params["w1b"], W)
    wm2b = _band_conv_weight(params["w2b"], W)
    b1a = jnp.tile(params["b1a"], (1, W))
    b2a = jnp.tile(params["b2a"], (1, W))
    b1b = jnp.tile(params["b1b"], (1, W))
    b2b = jnp.tile(params["b2b"], (1, W))
    wa = _upsample_conv_matrix(params["wo"], aw)       # (W*C, W2*Cout)
    bo = jnp.tile(params["bo"], (1, W2))               # (1, W2*Cout)

    def full(arr):
        nd = arr.ndim
        return pl.BlockSpec(arr.shape, lambda b, _nd=nd: (0,) * _nd)

    x_spec = pl.BlockSpec((1, H, WC), lambda b: (b, 0, 0))
    out_spec = pl.BlockSpec((1, H2, WC2), lambda b: (b, 0, 0))

    in_specs = [
        x_spec, x_spec,
        full(wm1a), full(b1a), full(wm2a), full(b2a),   # rcu1
        full(wm1b), full(b1b), full(wm2b), full(b2b),   # rcu2
        full(wa), full(bo),                             # fused out_conv + W-interp
        full(ah),                                       # H-interp
    ]

    out = pl.pallas_call(
        ffb_kernel,
        out_shape=jax.ShapeDtypeStruct((N, H2, WC2), jnp.float32),
        grid_spec=pltpu.PrefetchScalarGridSpec(
            num_scalar_prefetch=0,
            grid=(N,),
            in_specs=in_specs,
            out_specs=out_spec,
        ),
        compiler_params=pltpu.CompilerParams(
            dimension_semantics=("parallel",)),
    )(x0f, x1f,
      wm1a, b1a, wm2a, b2a,
      wm1b, b1b, wm2b, b2b,
      wa, bo, ah)

    return out.reshape(N, H2, W2, Cout)


# ------------------------- pure-JAX reference ------------------------------

def _ref_forward(x0, x1, p):
    def conv3x3(x, w, b):
        y = jax.lax.conv_general_dilated(
            x, w, window_strides=(1, 1), padding=((1, 1), (1, 1)),
            dimension_numbers=("NHWC", "HWIO", "NHWC"))
        return y + b.reshape(1, 1, 1, -1)

    def rcu(x, w1, b1, w2, b2):
        out = jnp.maximum(x, 0.0)
        out = conv3x3(out, w1, b1)
        out = jnp.maximum(out, 0.0)
        out = conv3x3(out, w2, b2)
        return out + x

    N, H, W, C = x0.shape
    ah = _interp_matrix(2 * H, H)
    aw = _interp_matrix(2 * W, W)
    out = x0 + rcu(x1, p["w1a"], p["b1a"], p["w2a"], p["b2a"])
    out = rcu(out, p["w1b"], p["b1b"], p["w2b"], p["b2b"])
    out = jnp.einsum("oh,nhwc->nowc", ah, out)
    out = jnp.einsum("pw,nowc->nopc", aw, out)
    out = jnp.einsum("nhwc,cd->nhwd", out, p["wo"]) + p["bo"].reshape(1, 1, 1, -1)
    return out


# ---------------------------------- main -----------------------------------

if __name__ == "__main__":
    N, C, H, W = 2, 8, 16, 16          # features = C = 8  ->  W*C = 128 lanes
    key = jax.random.PRNGKey(0)
    ks = jax.random.split(key, 14)

    def winit(k, shape, fan_in):
        return (jax.random.normal(k, shape, jnp.float32) / np.sqrt(fan_in)).astype(jnp.float32)

    params = {
        # resConfUnit1
        "w1a": winit(ks[0], (3, 3, C, C), 9 * C), "b1a": winit(ks[1], (1, C), C),
        "w2a": winit(ks[2], (3, 3, C, C), 9 * C), "b2a": winit(ks[3], (1, C), C),
        # resConfUnit2
        "w1b": winit(ks[4], (3, 3, C, C), 9 * C), "b1b": winit(ks[5], (1, C), C),
        "w2b": winit(ks[6], (3, 3, C, C), 9 * C), "b2b": winit(ks[7], (1, C), C),
        # out_conv (expand=False -> out_features = features)
        "wo": winit(ks[8], (C, C), C), "bo": winit(ks[9], (1, C), C),
    }

    x0 = jax.random.normal(ks[10], (N, H, W, C), jnp.float32)
    x1 = jax.random.normal(ks[11], (N, H, W, C), jnp.float32)

    out = feature_fusion_block(x0, x1, params)
    out = jax.block_until_ready(out)

    ref = jax.block_until_ready(_ref_forward(x0, x1, params))
    assert out.shape == (N, 2 * H, 2 * W, C)
    np.testing.assert_allclose(np.asarray(out), np.asarray(ref), atol=1e-3, rtol=1e-3)

    print("KERNEL_OK")
</pallas_src>

<mosaic_0001>
module attributes {stable_mosaic.version = 11 : i64} {
  func.func @ffb_kernel(%arg0: i32, %arg1: memref<1x16x128xf32, #tpu.memory_space<vmem>>, %arg2: memref<1x16x128xf32, #tpu.memory_space<vmem>>, %arg3: memref<384x128xf32, #tpu.memory_space<vmem>>, %arg4: memref<1x128xf32, #tpu.memory_space<vmem>>, %arg5: memref<384x128xf32, #tpu.memory_space<vmem>>, %arg6: memref<1x128xf32, #tpu.memory_space<vmem>>, %arg7: memref<384x128xf32, #tpu.memory_space<vmem>>, %arg8: memref<1x128xf32, #tpu.memory_space<vmem>>, %arg9: memref<384x128xf32, #tpu.memory_space<vmem>>, %arg10: memref<1x128xf32, #tpu.memory_space<vmem>>, %arg11: memref<128x256xf32, #tpu.memory_space<vmem>>, %arg12: memref<1x256xf32, #tpu.memory_space<vmem>>, %arg13: memref<32x16xf32, #tpu.memory_space<vmem>>, %arg14: memref<1x32x256xf32, #tpu.memory_space<vmem>>) attributes {dimension_semantics = [#tpu.dimension_semantics<parallel>], iteration_bounds = array<i64: 2>, scalar_prefetch = 0 : i64, scratch_operands = 0 : i64, tpu.core_type = #tpu.core_type<tc>, window_params = [{transform_indices = @transform_0, window_bounds = array<i64: 1, 16, 128>}, {transform_indices = @transform_1, window_bounds = array<i64: 1, 16, 128>}, {pipeline_mode = #tpu.pipeline_mode<synchronous>, transform_indices = @transform_2, window_bounds = array<i64: 384, 128>}, {pipeline_mode = #tpu.pipeline_mode<synchronous>, transform_indices = @transform_3, window_bounds = array<i64: 1, 128>}, {pipeline_mode = #tpu.pipeline_mode<synchronous>, transform_indices = @transform_4, window_bounds = array<i64: 384, 128>}, {pipeline_mode = #tpu.pipeline_mode<synchronous>, transform_indices = @transform_5, window_bounds = array<i64: 1, 128>}, {pipeline_mode = #tpu.pipeline_mode<synchronous>, transform_indices = @transform_6, window_bounds = array<i64: 384, 128>}, {pipeline_mode = #tpu.pipeline_mode<synchronous>, transform_indices = @transform_7, window_bounds = array<i64: 1, 128>}, {pipeline_mode = #tpu.pipeline_mode<synchronous>, transform_indices = @transform_8, window_bounds = array<i64: 384, 128>}, {pipeline_mode = #tpu.pipeline_mode<synchronous>, transform_indices = @transform_9, window_bounds = array<i64: 1, 128>}, {pipeline_mode = #tpu.pipeline_mode<synchronous>, transform_indices = @transform_10, window_bounds = array<i64: 128, 256>}, {pipeline_mode = #tpu.pipeline_mode<synchronous>, transform_indices = @transform_11, window_bounds = array<i64: 1, 256>}, {pipeline_mode = #tpu.pipeline_mode<synchronous>, transform_indices = @transform_12, window_bounds = array<i64: 32, 16>}, {transform_indices = @transform_13, window_bounds = array<i64: 1, 32, 256>}]} {
    %c0 = arith.constant 0 : index
    %c0_0 = arith.constant 0 : index
    %c0_1 = arith.constant 0 : index
    %0 = vector.load %arg1[%c0, %c0_0, %c0_1] : memref<1x16x128xf32, #tpu.memory_space<vmem>>, vector<1x16x128xf32>
    %1 = vector.shape_cast %0 : vector<1x16x128xf32> to vector<16x128xf32>
    %c0_2 = arith.constant 0 : index
    %c0_3 = arith.constant 0 : index
    %c0_4 = arith.constant 0 : index
    %2 = vector.load %arg2[%c0_2, %c0_3, %c0_4] : memref<1x16x128xf32, #tpu.memory_space<vmem>>, vector<1x16x128xf32>
    %3 = vector.shape_cast %2 : vector<1x16x128xf32> to vector<16x128xf32>
    %4 = tpu.iota {dimensions = array<i32: 0>} : vector<16x128xi32>
    %cst = arith.constant 0.000000e+00 : f32
    %5 = vector.broadcast %cst : f32 to vector<16x128xf32>
    %6 = arith.maximumf %3, %5 : vector<16x128xf32>
    %c1_i32 = arith.constant 1 : i32
    %7 = tpu.dynamic_rotate %6 by %c1_i32 dim 0 : vector<16x128xf32>, i32 -> vector<16x128xf32>
    %c1_i32_5 = arith.constant 1 : i32
    %8 = vector.broadcast %c1_i32_5 : i32 to vector<16x128xi32>
    %9 = arith.cmpi sge, %4, %8 : vector<16x128xi32>
    %cst_6 = arith.constant 0.000000e+00 : f32
    %10 = vector.broadcast %cst_6 : f32 to vector<16x128xf32>
    %11 = arith.select %9, %7, %10 : vector<16x128xi1>, vector<16x128xf32>
    %c15_i32 = arith.constant 15 : i32
    %12 = tpu.dynamic_rotate %6 by %c15_i32 dim 0 : vector<16x128xf32>, i32 -> vector<16x128xf32>
    %c15_i32_7 = arith.constant 15 : i32
    %13 = vector.broadcast %c15_i32_7 : i32 to vector<16x128xi32>
    %14 = arith.cmpi slt, %4, %13 : vector<16x128xi32>
    %cst_8 = arith.constant 0.000000e+00 : f32
    %15 = vector.broadcast %cst_8 : f32 to vector<16x128xf32>
    %16 = arith.select %14, %12, %15 : vector<16x128xi1>, vector<16x128xf32>
    %17 = tpu.concatenate %11, %6, %16 in 1 : vector<16x128xf32>, vector<16x128xf32>, vector<16x128xf32> -> vector<16x384xf32>
    %c0_9 = arith.constant 0 : index
    %c0_10 = arith.constant 0 : index
    %18 = vector.load %arg3[%c0_9, %c0_10] : memref<384x128xf32, #tpu.memory_space<vmem>>, vector<384x128xf32>
    %cst_11 = arith.constant dense<0.000000e+00> : vector<16x128xf32>
    %19 = tpu.matmul %17, %18, %cst_11 {dimension_numbers = #tpu.dot_dimension_numbers<[1], [0], [0], [1], [0, 0, 1, 1], [], []>} : vector<16x384xf32>, vector<384x128xf32>, vector<16x128xf32> -> vector<16x128xf32>
    %c0_12 = arith.constant 0 : index
    %c0_13 = arith.constant 0 : index
    %20 = vector.load %arg4[%c0_12, %c0_13] : memref<1x128xf32, #tpu.memory_space<vmem>>, vector<1x128xf32>
    %21 = vector.broadcast %20 : vector<1x128xf32> to vector<16x128xf32>
    %22 = arith.addf %19, %21 : vector<16x128xf32>
    %cst_14 = arith.constant 0.000000e+00 : f32
    %23 = vector.broadcast %cst_14 : f32 to vector<16x128xf32>
    %24 = arith.maximumf %22, %23 : vector<16x128xf32>
    %c1_i32_15 = arith.constant 1 : i32
    %25 = tpu.dynamic_rotate %24 by %c1_i32_15 dim 0 : vector<16x128xf32>, i32 -> vector<16x128xf32>
    %c1_i32_16 = arith.constant 1 : i32
    %26 = vector.broadcast %c1_i32_16 : i32 to vector<16x128xi32>
    %27 = arith.cmpi sge, %4, %26 : vector<16x128xi32>
    %cst_17 = arith.constant 0.000000e+00 : f32
    %28 = vector.broadcast %cst_17 : f32 to vector<16x128xf32>
    %29 = arith.select %27, %25, %28 : vector<16x128xi1>, vector<16x128xf32>
    %c15_i32_18 = arith.constant 15 : i32
    %30 = tpu.dynamic_rotate %24 by %c15_i32_18 dim 0 : vector<16x128xf32>, i32 -> vector<16x128xf32>
    %c15_i32_19 = arith.constant 15 : i32
    %31 = vector.broadcast %c15_i32_19 : i32 to vector<16x128xi32>
    %32 = arith.cmpi slt, %4, %31 : vector<16x128xi32>
    %cst_20 = arith.constant 0.000000e+00 : f32
    %33 = vector.broadcast %cst_20 : f32 to vector<16x128xf32>
    %34 = arith.select %32, %30, %33 : vector<16x128xi1>, vector<16x128xf32>
    %35 = tpu.concatenate %29, %24, %34 in 1 : vector<16x128xf32>, vector<16x128xf32>, vector<16x128xf32> -> vector<16x384xf32>
    %c0_21 = arith.constant 0 : index
    %c0_22 = arith.constant 0 : index
    %36 = vector.load %arg5[%c0_21, %c0_22] : memref<384x128xf32, #tpu.memory_space<vmem>>, vector<384x128xf32>
    %cst_23 = arith.constant dense<0.000000e+00> : vector<16x128xf32>
    %37 = tpu.matmul %35, %36, %cst_23 {dimension_numbers = #tpu.dot_dimension_numbers<[1], [0], [0], [1], [0, 0, 1, 1], [], []>} : vector<16x384xf32>, vector<384x128xf32>, vector<16x128xf32> -> vector<16x128xf32>
    %c0_24 = arith.constant 0 : index
    %c0_25 = arith.constant 0 : index
    %38 = vector.load %arg6[%c0_24, %c0_25] : memref<1x128xf32, #tpu.memory_space<vmem>>, vector<1x128xf32>
    %39 = vector.broadcast %38 : vector<1x128xf32> to vector<16x128xf32>
    %40 = arith.addf %37, %39 : vector<16x128xf32>
    %41 = arith.addf %40, %3 : vector<16x128xf32>
    %42 = arith.addf %1, %41 : vector<16x128xf32>
    %cst_26 = arith.constant 0.000000e+00 : f32
    %43 = vector.broadcast %cst_26 : f32 to vector<16x128xf32>
    %44 = arith.maximumf %42, %43 : vector<16x128xf32>
    %c1_i32_27 = arith.constant 1 : i32
    %45 = tpu.dynamic_rotate %44 by %c1_i32_27 dim 0 : vector<16x128xf32>, i32 -> vector<16x128xf32>
    %c1_i32_28 = arith.constant 1 : i32
    %46 = vector.broadcast %c1_i32_28 : i32 to vector<16x128xi32>
    %47 = arith.cmpi sge, %4, %46 : vector<16x128xi32>
    %cst_29 = arith.constant 0.000000e+00 : f32
    %48 = vector.broadcast %cst_29 : f32 to vector<16x128xf32>
    %49 = arith.select %47, %45, %48 : vector<16x128xi1>, vector<16x128xf32>
    %c15_i32_30 = arith.constant 15 : i32
    %50 = tpu.dynamic_rotate %44 by %c15_i32_30 dim 0 : vector<16x128xf32>, i32 -> vector<16x128xf32>
    %c15_i32_31 = arith.constant 15 : i32
    %51 = vector.broadcast %c15_i32_31 : i32 to vector<16x128xi32>
    %52 = arith.cmpi slt, %4, %51 : vector<16x128xi32>
    %cst_32 = arith.constant 0.000000e+00 : f32
    %53 = vector.broadcast %cst_32 : f32 to vector<16x128xf32>
    %54 = arith.select %52, %50, %53 : vector<16x128xi1>, vector<16x128xf32>
    %55 = tpu.concatenate %49, %44, %54 in 1 : vector<16x128xf32>, vector<16x128xf32>, vector<16x128xf32> -> vector<16x384xf32>
    %c0_33 = arith.constant 0 : index
    %c0_34 = arith.constant 0 : index
    %56 = vector.load %arg7[%c0_33, %c0_34] : memref<384x128xf32, #tpu.memory_space<vmem>>, vector<384x128xf32>
    %cst_35 = arith.constant dense<0.000000e+00> : vector<16x128xf32>
    %57 = tpu.matmul %55, %56, %cst_35 {dimension_numbers = #tpu.dot_dimension_numbers<[1], [0], [0], [1], [0, 0, 1, 1], [], []>} : vector<16x384xf32>, vector<384x128xf32>, vector<16x128xf32> -> vector<16x128xf32>
    %c0_36 = arith.constant 0 : index
    %c0_37 = arith.constant 0 : index
    %58 = vector.load %arg8[%c0_36, %c0_37] : memref<1x128xf32, #tpu.memory_space<vmem>>, vector<1x128xf32>
    %59 = vector.broadcast %58 : vector<1x128xf32> to vector<16x128xf32>
    %60 = arith.addf %57, %59 : vector<16x128xf32>
    %cst_38 = arith.constant 0.000000e+00 : f32
    %61 = vector.broadcast %cst_38 : f32 to vector<16x128xf32>
    %62 = arith.maximumf %60, %61 : vector<16x128xf32>
    %c1_i32_39 = arith.constant 1 : i32
    %63 = tpu.dynamic_rotate %62 by %c1_i32_39 dim 0 : vector<16x128xf32>, i32 -> vector<16x128xf32>
    %c1_i32_40 = arith.constant 1 : i32
    %64 = vector.broadcast %c1_i32_40 : i32 to vector<16x128xi32>
    %65 = arith.cmpi sge, %4, %64 : vector<16x128xi32>
    %cst_41 = arith.constant 0.000000e+00 : f32
    %66 = vector.broadcast %cst_41 : f32 to vector<16x128xf32>
    %67 = arith.select %65, %63, %66 : vector<16x128xi1>, vector<16x128xf32>
    %c15_i32_42 = arith.constant 15 : i32
    %68 = tpu.dynamic_rotate %62 by %c15_i32_42 dim 0 : vector<16x128xf32>, i32 -> vector<16x128xf32>
    %c15_i32_43 = arith.constant 15 : i32
    %69 = vector.broadcast %c15_i32_43 : i32 to vector<16x128xi32>
    %70 = arith.cmpi slt, %4, %69 : vector<16x128xi32>
    %cst_44 = arith.constant 0.000000e+00 : f32
    %71 = vector.broadcast %cst_44 : f32 to vector<16x128xf32>
    %72 = arith.select %70, %68, %71 : vector<16x128xi1>, vector<16x128xf32>
    %73 = tpu.concatenate %67, %62, %72 in 1 : vector<16x128xf32>, vector<16x128xf32>, vector<16x128xf32> -> vector<16x384xf32>
    %c0_45 = arith.constant 0 : index
    %c0_46 = arith.constant 0 : index
    %74 = vector.load %arg9[%c0_45, %c0_46] : memref<384x128xf32, #tpu.memory_space<vmem>>, vector<384x128xf32>
    %cst_47 = arith.constant dense<0.000000e+00> : vector<16x128xf32>
    %75 = tpu.matmul %73, %74, %cst_47 {dimension_numbers = #tpu.dot_dimension_numbers<[1], [0], [0], [1], [0, 0, 1, 1], [], []>} : vector<16x384xf32>, vector<384x128xf32>, vector<16x128xf32> -> vector<16x128xf32>
    %c0_48 = arith.constant 0 : index
    %c0_49 = arith.constant 0 : index
    %76 = vector.load %arg10[%c0_48, %c0_49] : memref<1x128xf32, #tpu.memory_space<vmem>>, vector<1x128xf32>
    %77 = vector.broadcast %76 : vector<1x128xf32> to vector<16x128xf32>
    %78 = arith.addf %75, %77 : vector<16x128xf32>
    %79 = arith.addf %78, %42 : vector<16x128xf32>
    %c0_50 = arith.constant 0 : index
    %c0_51 = arith.constant 0 : index
    %80 = vector.load %arg11[%c0_50, %c0_51] : memref<128x256xf32, #tpu.memory_space<vmem>>, vector<128x256xf32>
    %cst_52 = arith.constant dense<0.000000e+00> : vector<16x256xf32>
    %81 = tpu.matmul %79, %80, %cst_52 {dimension_numbers = #tpu.dot_dimension_numbers<[1], [0], [0], [1], [0, 0, 1, 1], [], []>} : vector<16x128xf32>, vector<128x256xf32>, vector<16x256xf32> -> vector<16x256xf32>
    %c0_53 = arith.constant 0 : index
    %c0_54 = arith.constant 0 : index
    %82 = vector.load %arg13[%c0_53, %c0_54] : memref<32x16xf32, #tpu.memory_space<vmem>>, vector<32x16xf32>
    %cst_55 = arith.constant dense<0.000000e+00> : vector<32x256xf32>
    %83 = tpu.matmul %82, %81, %cst_55 {dimension_numbers = #tpu.dot_dimension_numbers<[1], [0], [0], [1], [0, 0, 1, 1], [], []>} : vector<32x16xf32>, vector<16x256xf32>, vector<32x256xf32> -> vector<32x256xf32>
    %c0_56 = arith.constant 0 : index
    %c0_57 = arith.constant 0 : index
    %84 = vector.load %arg12[%c0_56, %c0_57] : memref<1x256xf32, #tpu.memory_space<vmem>>, vector<1x256xf32>
    %85 = vector.broadcast %84 : vector<1x256xf32> to vector<32x256xf32>
    %86 = arith.addf %83, %85 : vector<32x256xf32>
    %c0_58 = arith.constant 0 : index
    %c0_59 = arith.constant 0 : index
    %c0_60 = arith.constant 0 : index
    %87 = vector.load %arg14[%c0_58, %c0_59, %c0_60] : memref<1x32x256xf32, #tpu.memory_space<vmem>>, vector<1x32x256xf32>
    %88 = vector.shape_cast %87 : vector<1x32x256xf32> to vector<32x256xf32>
    %89 = vector.shape_cast %86 : vector<32x256xf32> to vector<1x32x256xf32>
    tpu.vector_store %arg14[%c0_58, %c0_59, %c0_60], %89 {strides = array<i32>} : memref<1x32x256xf32, #tpu.memory_space<vmem>>, vector<1x32x256xf32>,
    return
  }
  func.func @transform_0(%arg0: i32) -> (i32, i32, i32) {
    %c0_i32 = arith.constant 0 : i32
    %c0_i32_0 = arith.constant 0 : i32
    %c0_i32_1 = arith.constant 0 : i32
    return %arg0, %c0_i32, %c0_i32_0 : i32, i32, i32
  }
  func.func @transform_1(%arg0: i32) -> (i32, i32, i32) {
    %c0_i32 = arith.constant 0 : i32
    %c0_i32_0 = arith.constant 0 : i32
    %c0_i32_1 = arith.constant 0 : i32
    return %arg0, %c0_i32, %c0_i32_0 : i32, i32, i32
  }
  func.func @transform_2(%arg0: i32) -> (i32, i32) {
    %c0_i32 = arith.constant 0 : i32
    %c0_i32_0 = arith.constant 0 : i32
    %c0_i32_1 = arith.constant 0 : i32
    return %c0_i32, %c0_i32_0 : i32, i32
  }
  func.func @transform_3(%arg0: i32) -> (i32, i32) {
    %c0_i32 = arith.constant 0 : i32
    %c0_i32_0 = arith.constant 0 : i32
    %c0_i32_1 = arith.constant 0 : i32
    return %c0_i32, %c0_i32_0 : i32, i32
  }
  func.func @transform_4(%arg0: i32) -> (i32, i32) {
    %c0_i32 = arith.constant 0 : i32
    %c0_i32_0 = arith.constant 0 : i32
    %c0_i32_1 = arith.constant 0 : i32
    return %c0_i32, %c0_i32_0 : i32, i32
  }
  func.func @transform_5(%arg0: i32) -> (i32, i32) {
    %c0_i32 = arith.constant 0 : i32
    %c0_i32_0 = arith.constant 0 : i32
    %c0_i32_1 = arith.constant 0 : i32
    return %c0_i32, %c0_i32_0 : i32, i32
  }
  func.func @transform_6(%arg0: i32) -> (i32, i32) {
    %c0_i32 = arith.constant 0 : i32
    %c0_i32_0 = arith.constant 0 : i32
    %c0_i32_1 = arith.constant 0 : i32
    return %c0_i32, %c0_i32_0 : i32, i32
  }
  func.func @transform_7(%arg0: i32) -> (i32, i32) {
    %c0_i32 = arith.constant 0 : i32
    %c0_i32_0 = arith.constant 0 : i32
    %c0_i32_1 = arith.constant 0 : i32
    return %c0_i32, %c0_i32_0 : i32, i32
  }
  func.func @transform_8(%arg0: i32) -> (i32, i32) {
    %c0_i32 = arith.constant 0 : i32
    %c0_i32_0 = arith.constant 0 : i32
    %c0_i32_1 = arith.constant 0 : i32
    return %c0_i32, %c0_i32_0 : i32, i32
  }
  func.func @transform_9(%arg0: i32) -> (i32, i32) {
    %c0_i32 = arith.constant 0 : i32
    %c0_i32_0 = arith.constant 0 : i32
    %c0_i32_1 = arith.constant 0 : i32
    return %c0_i32, %c0_i32_0 : i32, i32
  }
  func.func @transform_10(%arg0: i32) -> (i32, i32) {
    %c0_i32 = arith.constant 0 : i32
    %c0_i32_0 = arith.constant 0 : i32
    %c0_i32_1 = arith.constant 0 : i32
    return %c0_i32, %c0_i32_0 : i32, i32
  }
  func.func @transform_11(%arg0: i32) -> (i32, i32) {
    %c0_i32 = arith.constant 0 : i32
    %c0_i32_0 = arith.constant 0 : i32
    %c0_i32_1 = arith.constant 0 : i32
    return %c0_i32, %c0_i32_0 : i32, i32
  }
  func.func @transform_12(%arg0: i32) -> (i32, i32) {
    %c0_i32 = arith.constant 0 : i32
    %c0_i32_0 = arith.constant 0 : i32
    %c0_i32_1 = arith.constant 0 : i32
    return %c0_i32, %c0_i32_0 : i32, i32
  }
  func.func @transform_13(%arg0: i32) -> (i32, i32, i32) {
    %c0_i32 = arith.constant 0 : i32
    %c0_i32_0 = arith.constant 0 : i32
    %c0_i32_1 = arith.constant 0 : i32
    return %arg0, %c0_i32, %c0_i32_0 : i32, i32, i32
  }
}

</mosaic_0001>

<llo_original>
// kernel: tpu_custom_call.1
$region0: #{tpu_custom_call.1}
  #allocation0 [shape = 'u32[]', space=smem, size = 0x4, offset = 0x4, fixed_abs, tag = 'smem constant byte address 0x4 - core index']
  #allocation1 [shape = 'u32[72,128]{1,0:T(1,128)}', space=vmem, size = 0x9000, scoped, tag = 'internal scratch']
  %s0 = inlined_call_operand.vmem [shape: f32[2,16,128], index: 0, kind: input, shape index: {}]
  %s1 = inlined_call_operand.hbm [shape: f32[2,16,128], index: 1, kind: input, shape index: {}]
  %s2 = inlined_call_operand.hbm [shape: f32[384,128], index: 2, kind: input, shape index: {}]
  %s3 = inlined_call_operand.vmem [shape: f32[1,128], index: 3, kind: input, shape index: {}]
  %s4 = inlined_call_operand.hbm [shape: f32[384,128], index: 4, kind: input, shape index: {}]
  %s5 = inlined_call_operand.vmem [shape: f32[1,128], index: 5, kind: input, shape index: {}]
  %s6 = inlined_call_operand.hbm [shape: f32[384,128], index: 6, kind: input, shape index: {}]
  %s7 = inlined_call_operand.vmem [shape: f32[1,128], index: 7, kind: input, shape index: {}]
  %s8 = inlined_call_operand.hbm [shape: f32[384,128], index: 8, kind: input, shape index: {}]
  %s9 = inlined_call_operand.vmem [shape: f32[1,128], index: 9, kind: input, shape index: {}]
  %s10 = inlined_call_operand.hbm [shape: f32[128,256], index: 10, kind: input, shape index: {}]
  %s11 = inlined_call_operand.vmem [shape: f32[1,256], index: 11, kind: input, shape index: {}]
  %s12 = inlined_call_operand.vmem [shape: f32[32,16], index: 12, kind: input, shape index: {}]
  %s13 = inlined_call_operand.hbm [shape: f32[2,32,256], index: 13, kind: output, shape index: {}]
  %s14 = sld [smem:[#allocation0]]
  $region109: #{tpu_custom_call.1} parent=0
    _
  %s16 = ssub.s32 1, %s14
  %s17 = scalar_select 0, %s16, %s14
  $region1: #{tpu_custom_call.1} parent=0
    #allocation2 [shape = 'u8[16384]{0}', space=vmem, size = 0x4000, scoped, tag = 'input window, operand 1']
    #allocation3 [shape = 's32[2]{0}', space=sflag, size = 0x8, scoped, tag = 'scoped memory for tpu_custom_call.1']
    #allocation4 [shape = 's32[2]{0}', space=sflag, size = 0x8, scoped, tag = 'scoped memory for tpu_custom_call.1']
    #allocation5 [shape = 'u8[196608]{0}', space=vmem, size = 0x30000, scoped, tag = 'input window, operand 2, single buffered']
    #allocation6 [shape = 's32[1]{0}', space=sflag, size = 0x4, scoped, tag = 'scoped memory for tpu_custom_call.1']
    #allocation7 [shape = 'u8[196608]{0}', space=vmem, size = 0x30000, scoped, tag = 'input window, operand 4, single buffered']
    #allocation8 [shape = 'u8[196608]{0}', space=vmem, size = 0x30000, scoped, tag = 'input window, operand 6, single buffered']
    #allocation9 [shape = 's32[1]{0}', space=sflag, size = 0x4, scoped, tag = 'scoped memory for tpu_custom_call.1']
    #allocation10 [shape = 'u8[196608]{0}', space=vmem, size = 0x30000, scoped, tag = 'input window, operand 8, single buffered']
    #allocation11 [shape = 'u8[131072]{0}', space=vmem, size = 0x20000, scoped, tag = 'input window, operand 10, single buffered']
    #allocation12 [shape = 's32[1]{0}', space=sflag, size = 0x4, scoped, tag = 'scoped memory for tpu_custom_call.1']
    #allocation13 [shape = 'u8[65536]{0}', space=vmem, size = 0x10000, scoped, tag = 'output window, operand 0']
    %18 = vsyncpa [#allocation3], 0
    %s19 = scalar_lea.sflag [#allocation3], 1
    %20 = vsyncpa %s19, 0
    %21 = vsyncpa [#allocation6], 0
    %22 = vsyncpa [#allocation9], 0
    %23 = vsyncpa [#allocation12], 0
    %24 = vsyncpa [#allocation4], 0
    %s25 = scalar_lea.sflag [#allocation4], 1
    %26 = vsyncpa %s25, 0
    loop: start=0, step=1, limit=4
    $region2: #{tpu_custom_call.1} parent=1 // loop_pre_header
      _
    $region3: #{tpu_custom_call.1} parent=1 // loop_header
      %s28 = sphi 0, %s32
      %p29 = scmp.ge.s32.totalorder %s28, 4
      %s38 = sphi 0, %s40
      %s41 = sphi 0, %s38
      %s42 = sphi 0, %s41
      %s58 = sphi 0, %s42
      %s64 = sphi 0, %s66
      %s67 = sphi 0, %s64
      %s68 = sphi 0, %s67
      %s84 = sphi 0, %s68
      %s88 = sphi 0, %s88
      %s90 = sphi 0, %s88
      %s91 = sphi 0, %s90
      %s105 = sphi 0, %s91
      %s109 = sphi 0, %s109
      %s111 = sphi 0, %s109
      %s112 = sphi 0, %s111
      %s126 = sphi 0, %s112
      %s130 = sphi 0, %s130
      %s132 = sphi 0, %s130
      %s133 = sphi 0, %s132
      %s147 = sphi 0, %s133
      %s151 = sphi 0, %s151
      %s153 = sphi 0, %s151
      %s154 = sphi 0, %s153
      %s168 = sphi 0, %s154
      %s172 = sphi 0, %s172
      %s174 = sphi 0, %s172
      %s175 = sphi 0, %s174
      %s189 = sphi 0, %s175
      %s193 = sphi 0, %s193
      %s195 = sphi 0, %s193
      %s196 = sphi 0, %s195
      %s210 = sphi 0, %s196
      %s214 = sphi 0, %s214
      %s216 = sphi 0, %s214
      %s217 = sphi 0, %s216
      %s231 = sphi 0, %s217
      %s235 = sphi 0, %s235
      %s237 = sphi 0, %s235
      %s238 = sphi 0, %s237
      %s252 = sphi 0, %s238
      %s256 = sphi 0, %s256
      %s258 = sphi 0, %s256
      %s259 = sphi 0, %s258
      %s273 = sphi 0, %s259
      %s277 = sphi 0, %s277
      %s279 = sphi 0, %s277
      %s280 = sphi 0, %s279
      %s294 = sphi 0, %s280
      %s298 = sphi 0, %s298
      %s300 = sphi 0, %s298
      %s301 = sphi 0, %s300
      %s315 = sphi 0, %s301
      %s321 = sphi 0, %s323
      %s324 = sphi 0, %s321
      %s325 = sphi 0, %s324
      %s341 = sphi 0, %s325
    $region4: #{tpu_custom_call.1} parent=1 // loop_header_branch
      %31 = sbr.rel (%p29) target = $region8
    $region5: #{tpu_custom_call.1} parent=1 // loop_body
      %s33 = ssub.s32 %s28, 1
      %s34 = ssub.s32 %s28, 2
      %s35 = sadd.s32 %s28, 1
      %s36 = ssub.s32 %s28, %s35
      %p37 = scmp.eq.s32.totalorder %s36, 0
      %s39 = sadd.s32 %s38, 1
      %s40 = scalar_select %p37, %s38, %s39
      %p43 = pneg %p37
      %p44 = scmp.eq.s32.totalorder %s28, 1
      %p45 = por %p43, %p44
      %p46 = scmp.ne.s32.totalorder %s38, %s41
      %p47 = scmp.eq.s32.totalorder %s28, 0
      %p48 = por %p46, %p47
      %p49 = scmp.ne.s32.totalorder %s38, %s41
      %p50 = scmp.eq.s32.totalorder %s33, 1
      %p51 = por %p49, %p50
      %p52 = scmp.ne.s32.totalorder %s41, %s42
      %p53 = scmp.eq.s32.totalorder %s33, 0
      %p54 = por %p52, %p53
      %p55 = scmp.ne.s32.totalorder %s41, %s42
      %p56 = scmp.eq.s32.totalorder %s34, 1
      %p57 = por %p55, %p56
      %p59 = scmp.ne.s32.totalorder %s42, %s58
      %p60 = scmp.eq.s32.totalorder %s34, 0
      %p61 = por %p59, %p60
      %s62 = ssub.s32 %s28, %s35
      %p63 = scmp.eq.s32.totalorder %s62, 0
      %s65 = sadd.s32 %s64, 1
      %s66 = scalar_select %p63, %s64, %s65
      %p69 = pneg %p63
      %p70 = scmp.eq.s32.totalorder %s28, 1
      %p71 = por %p69, %p70
      %p72 = scmp.ne.s32.totalorder %s64, %s67
      %p73 = scmp.eq.s32.totalorder %s28, 0
      %p74 = por %p72, %p73
      %p75 = scmp.ne.s32.totalorder %s64, %s67
      %p76 = scmp.eq.s32.totalorder %s33, 1
      %p77 = por %p75, %p76
      %p78 = scmp.ne.s32.totalorder %s67, %s68
      %p79 = scmp.eq.s32.totalorder %s33, 0
      %p80 = por %p78, %p79
      %p81 = scmp.ne.s32.totalorder %s67, %s68
      %p82 = scmp.eq.s32.totalorder %s34, 1
      %p83 = por %p81, %p82
      %p85 = scmp.ne.s32.totalorder %s68, %s84
      %p86 = scmp.eq.s32.totalorder %s34, 0
      %p87 = por %p85, %p86
      %s89 = sadd.s32 %s88, 1
      %p92 = scmp.eq.s32.totalorder %s28, 1
      %p93 = scmp.ne.s32.totalorder %s88, %s90
      %p94 = scmp.eq.s32.totalorder %s28, 0
      %p95 = por %p93, %p94
      %p96 = scmp.ne.s32.totalorder %s88, %s90
      %p97 = scmp.eq.s32.totalorder %s33, 1
      %p98 = por %p96, %p97
      %p99 = scmp.ne.s32.totalorder %s90, %s91
      %p100 = scmp.eq.s32.totalorder %s33, 0
      %p101 = por %p99, %p100
      %p102 = scmp.ne.s32.totalorder %s90, %s91
      %p103 = scmp.eq.s32.totalorder %s34, 1
      %p104 = por %p102, %p103
      %p106 = scmp.ne.s32.totalorder %s91, %s105
      %p107 = scmp.eq.s32.totalorder %s34, 0
      %p108 = por %p106, %p107
      %s110 = sadd.s32 %s109, 1
      %p113 = scmp.eq.s32.totalorder %s28, 1
      %p114 = scmp.ne.s32.totalorder %s109, %s111
      %p115 = scmp.eq.s32.totalorder %s28, 0
      %p116 = por %p114, %p115
      %p117 = scmp.ne.s32.totalorder %s109, %s111
      %p118 = scmp.eq.s32.totalorder %s33, 1
      %p119 = por %p117, %p118
      %p120 = scmp.ne.s32.totalorder %s111, %s112
      %p121 = scmp.eq.s32.totalorder %s33, 0
      %p122 = por %p120, %p121
      %p123 = scmp.ne.s32.totalorder %s111, %s112
      %p124 = scmp.eq.s32.totalorder %s34, 1
      %p125 = por %p123, %p124
      %p127 = scmp.ne.s32.totalorder %s112, %s126
      %p128 = scmp.eq.s32.totalorder %s34, 0
      %p129 = por %p127, %p128
      %s131 = sadd.s32 %s130, 1
      %p134 = scmp.eq.s32.totalorder %s28, 1
      %p135 = scmp.ne.s32.totalorder %s130, %s132
      %p136 = scmp.eq.s32.totalorder %s28, 0
      %p137 = por %p135, %p136
      %p138 = scmp.ne.s32.totalorder %s130, %s132
      %p139 = scmp.eq.s32.totalorder %s33, 1
      %p140 = por %p138, %p139
      %p141 = scmp.ne.s32.totalorder %s132, %s133
      %p142 = scmp.eq.s32.totalorder %s33, 0
      %p143 = por %p141, %p142
      %p144 = scmp.ne.s32.totalorder %s132, %s133
      %p145 = scmp.eq.s32.totalorder %s34, 1
      %p146 = por %p144, %p145
      %p148 = scmp.ne.s32.totalorder %s133, %s147
      %p149 = scmp.eq.s32.totalorder %s34, 0
      %p150 = por %p148, %p149
      %s152 = sadd.s32 %s151, 1
      %p155 = scmp.eq.s32.totalorder %s28, 1
      %p156 = scmp.ne.s32.totalorder %s151, %s153
      %p157 = scmp.eq.s32.totalorder %s28, 0
      %p158 = por %p156, %p157
      %p159 = scmp.ne.s32.totalorder %s151, %s153
      %p160 = scmp.eq.s32.totalorder %s33, 1
      %p161 = por %p159, %p160
      %p162 = scmp.ne.s32.totalorder %s153, %s154
      %p163 = scmp.eq.s32.totalorder %s33, 0
      %p164 = por %p162, %p163
      %p165 = scmp.ne.s32.totalorder %s153, %s154
      %p166 = scmp.eq.s32.totalorder %s34, 1
      %p167 = por %p165, %p166
      %p169 = scmp.ne.s32.totalorder %s154, %s168
      %p170 = scmp.eq.s32.totalorder %s34, 0
      %p171 = por %p169, %p170
      %s173 = sadd.s32 %s172, 1
      %p176 = scmp.eq.s32.totalorder %s28, 1
      %p177 = scmp.ne.s32.totalorder %s172, %s174
      %p178 = scmp.eq.s32.totalorder %s28, 0
      %p179 = por %p177, %p178
      %p180 = scmp.ne.s32.totalorder %s172, %s174
      %p181 = scmp.eq.s32.totalorder %s33, 1
      %p182 = por %p180, %p181
      %p183 = scmp.ne.s32.totalorder %s174, %s175
      %p184 = scmp.eq.s32.totalorder %s33, 0
      %p185 = por %p183, %p184
      %p186 = scmp.ne.s32.totalorder %s174, %s175
      %p187 = scmp.eq.s32.totalorder %s34, 1
      %p188 = por %p186, %p187
      %p190 = scmp.ne.s32.totalorder %s175, %s189
      %p191 = scmp.eq.s32.totalorder %s34, 0
      %p192 = por %p190, %p191
      %s194 = sadd.s32 %s193, 1
      %p197 = scmp.eq.s32.totalorder %s28, 1
      %p198 = scmp.ne.s32.totalorder %s193, %s195
      %p199 = scmp.eq.s32.totalorder %s28, 0
      %p200 = por %p198, %p199
      %p201 = scmp.ne.s32.totalorder %s193, %s195
      %p202 = scmp.eq.s32.totalorder %s33, 1
      %p203 = por %p201, %p202
      %p204 = scmp.ne.s32.totalorder %s195, %s196
      %p205 = scmp.eq.s32.totalorder %s33, 0
      %p206 = por %p204, %p205
      %p207 = scmp.ne.s32.totalorder %s195, %s196
      %p208 = scmp.eq.s32.totalorder %s34, 1
      %p209 = por %p207, %p208
      %p211 = scmp.ne.s32.totalorder %s196, %s210
      %p212 = scmp.eq.s32.totalorder %s34, 0
      %p213 = por %p211, %p212
      %s215 = sadd.s32 %s214, 1
      %p218 = scmp.eq.s32.totalorder %s28, 1
      %p219 = scmp.ne.s32.totalorder %s214, %s216
      %p220 = scmp.eq.s32.totalorder %s28, 0
      %p221 = por %p219, %p220
      %p222 = scmp.ne.s32.totalorder %s214, %s216
      %p223 = scmp.eq.s32.totalorder %s33, 1
      %p224 = por %p222, %p223
      %p225 = scmp.ne.s32.totalorder %s216, %s217
      %p226 = scmp.eq.s32.totalorder %s33, 0
      %p227 = por %p225, %p226
      %p228 = scmp.ne.s32.totalorder %s216, %s217
      %p229 = scmp.eq.s32.totalorder %s34, 1
      %p230 = por %p228, %p229
      %p232 = scmp.ne.s32.totalorder %s217, %s231
      %p233 = scmp.eq.s32.totalorder %s34, 0
      %p234 = por %p232, %p233
      %s236 = sadd.s32 %s235, 1
      %p239 = scmp.eq.s32.totalorder %s28, 1
      %p240 = scmp.ne.s32.totalorder %s235, %s237
      %p241 = scmp.eq.s32.totalorder %s28, 0
      %p242 = por %p240, %p241
      %p243 = scmp.ne.s32.totalorder %s235, %s237
      %p244 = scmp.eq.s32.totalorder %s33, 1
      %p245 = por %p243, %p244
      %p246 = scmp.ne.s32.totalorder %s237, %s238
      %p247 = scmp.eq.s32.totalorder %s33, 0
      %p248 = por %p246, %p247
      %p249 = scmp.ne.s32.totalorder %s237, %s238
      %p250 = scmp.eq.s32.totalorder %s34, 1
      %p251 = por %p249, %p250
      %p253 = scmp.ne.s32.totalorder %s238, %s252
      %p254 = scmp.eq.s32.totalorder %s34, 0
      %p255 = por %p253, %p254
      %s257 = sadd.s32 %s256, 1
      %p260 = scmp.eq.s32.totalorder %s28, 1
      %p261 = scmp.ne.s32.totalorder %s256, %s258
      %p262 = scmp.eq.s32.totalorder %s28, 0
      %p263 = por %p261, %p262
      %p264 = scmp.ne.s32.totalorder %s256, %s258
      %p265 = scmp.eq.s32.totalorder %s33, 1
      %p266 = por %p264, %p265
      %p267 = scmp.ne.s32.totalorder %s258, %s259
      %p268 = scmp.eq.s32.totalorder %s33, 0
      %p269 = por %p267, %p268
      %p270 = scmp.ne.s32.totalorder %s258, %s259
      %p271 = scmp.eq.s32.totalorder %s34, 1
      %p272 = por %p270, %p271
      %p274 = scmp.ne.s32.totalorder %s259, %s273
      %p275 = scmp.eq.s32.totalorder %s34, 0
      %p276 = por %p274, %p275
      %s278 = sadd.s32 %s277, 1
      %p281 = scmp.eq.s32.totalorder %s28, 1
      %p282 = scmp.ne.s32.totalorder %s277, %s279
      %p283 = scmp.eq.s32.totalorder %s28, 0
      %p284 = por %p282, %p283
      %p285 = scmp.ne.s32.totalorder %s277, %s279
      %p286 = scmp.eq.s32.totalorder %s33, 1
      %p287 = por %p285, %p286
      %p288 = scmp.ne.s32.totalorder %s279, %s280
      %p289 = scmp.eq.s32.totalorder %s33, 0
      %p290 = por %p288, %p289
      %p291 = scmp.ne.s32.totalorder %s279, %s280
      %p292 = scmp.eq.s32.totalorder %s34, 1
      %p293 = por %p291, %p292
      %p295 = scmp.ne.s32.totalorder %s280, %s294
      %p296 = scmp.eq.s32.totalorder %s34, 0
      %p297 = por %p295, %p296
      %s299 = sadd.s32 %s298, 1
      %p302 = scmp.eq.s32.totalorder %s28, 1
      %p303 = scmp.ne.s32.totalorder %s298, %s300
      %p304 = scmp.eq.s32.totalorder %s28, 0
      %p305 = por %p303, %p304
      %p306 = scmp.ne.s32.totalorder %s298, %s300
      %p307 = scmp.eq.s32.totalorder %s33, 1
      %p308 = por %p306, %p307
      %p309 = scmp.ne.s32.totalorder %s300, %s301
      %p310 = scmp.eq.s32.totalorder %s33, 0
      %p311 = por %p309, %p310
      %p312 = scmp.ne.s32.totalorder %s300, %s301
      %p313 = scmp.eq.s32.totalorder %s34, 1
      %p314 = por %p312, %p313
      %p316 = scmp.ne.s32.totalorder %s301, %s315
      %p317 = scmp.eq.s32.totalorder %s34, 0
      %p318 = por %p316, %p317
      %s319 = ssub.s32 %s28, %s35
      %p320 = scmp.eq.s32.totalorder %s319, 0
      %s322 = sadd.s32 %s321, 1
      %s323 = scalar_select %p320, %s321, %s322
      %p326 = pneg %p320
      %p327 = scmp.eq.s32.totalorder %s28, 1
      %p328 = por %p326, %p327
      %p329 = scmp.ne.s32.totalorder %s321, %s324
      %p330 = scmp.eq.s32.totalorder %s28, 0
      %p331 = por %p329, %p330
      %p332 = scmp.ne.s32.totalorder %s321, %s324
      %p333 = scmp.eq.s32.totalorder %s33, 1
      %p334 = por %p332, %p333
      %p335 = scmp.ne.s32.totalorder %s324, %s325
      %p336 = scmp.eq.s32.totalorder %s33, 0
      %p337 = por %p335, %p336
      %p338 = scmp.ne.s32.totalorder %s324, %s325
      %p339 = scmp.eq.s32.totalorder %s34, 1
      %p340 = por %p338, %p339
      %p342 = scmp.ne.s32.totalorder %s325, %s341
      %p343 = scmp.eq.s32.totalorder %s34, 0
      %p344 = por %p342, %p343
      %p345 = scmp.le.s32.totalorder 1, %s28
      %p346 = scmp.lt.s32.totalorder %s28, 3
      %p347 = pnand %p345, %p346
      %p348 = pneg %p347
      // Predicated region
      $region9: #{tpu_custom_call.1} parent=5 // pred_check
        _
      $region10: #{tpu_custom_call.1} parent=5 // pred_check_branch
        %350 = sbr.rel (%p347) target = $region12
      $region11: #{tpu_custom_call.1} parent=5 // pred_region
        %s351 = ssub.s32 %s28, 1
        // Predicated region
        $region13: #{tpu_custom_call.1} parent=11 // pred_check
          %p352 = pneg %p101
        $region14: #{tpu_custom_call.1} parent=11 // pred_check_branch
          %354 = sbr.rel (%p352) target = $region16
        $region15: #{tpu_custom_call.1} parent=11 // pred_region
          %356 = vsyncadd [#allocation6], 0
          %s357 = sshll.u32 %s2, 4
          %s358 = int_to_ptr.hbm [resolvable:$true] %s357
          %s359 = sshll.u32 [#allocation5], 4
          %s360 = int_to_ptr.vmem [resolvable:$true] %s359
          %365 = dma.hbm_to_vmem [thread:$0]  %s358, 6144, %s360, [#allocation6], 128, 128, 8
        $region16: #{tpu_custom_call.1} parent=11 // pred_fallthru
          _
        // Predicated region
        $region17: #{tpu_custom_call.1} parent=11 // pred_check
          %p366 = pneg %p122
        $region18: #{tpu_custom_call.1} parent=11 // pred_check_branch
          %368 = sbr.rel (%p366) target = $region20
        $region19: #{tpu_custom_call.1} parent=11 // pred_region
          _
        $region20: #{tpu_custom_call.1} parent=11 // pred_fallthru
          _
        // Predicated region
        $region21: #{tpu_custom_call.1} parent=11 // pred_check
          %p369 = pneg %p143
        $region22: #{tpu_custom_call.1} parent=11 // pred_check_branch
          %371 = sbr.rel (%p369) target = $region24
        $region23: #{tpu_custom_call.1} parent=11 // pred_region
          %373 = vsyncadd [#allocation6], 0
          %s374 = sshll.u32 %s4, 4
          %s375 = int_to_ptr.hbm [resolvable:$true] %s374
          %s376 = sshll.u32 [#allocation7], 4
          %s377 = int_to_ptr.vmem [resolvable:$true] %s376
          %382 = dma.hbm_to_vmem [thread:$0]  %s375, 6144, %s377, [#allocation6], 128, 128, 8
        $region24: #{tpu_custom_call.1} parent=11 // pred_fallthru
          _
        // Predicated region
        $region25: #{tpu_custom_call.1} parent=11 // pred_check
          %p383 = pneg %p164
        $region26: #{tpu_custom_call.1} parent=11 // pred_check_branch
          %385 = sbr.rel (%p383) target = $region28
        $region27: #{tpu_custom_call.1} parent=11 // pred_region
          _
        $region28: #{tpu_custom_call.1} parent=11 // pred_fallthru
          _
        // Predicated region
        $region29: #{tpu_custom_call.1} parent=11 // pred_check
          %p386 = pneg %p185
        $region30: #{tpu_custom_call.1} parent=11 // pred_check_branch
          %388 = sbr.rel (%p386) target = $region32
        $region31: #{tpu_custom_call.1} parent=11 // pred_region
          %390 = vsyncadd [#allocation9], 0
          %s391 = sshll.u32 %s6, 4
          %s392 = int_to_ptr.hbm [resolvable:$true] %s391
          %s393 = sshll.u32 [#allocation8], 4
          %s394 = int_to_ptr.vmem [resolvable:$true] %s393
          %399 = dma.hbm_to_vmem [thread:$0]  %s392, 6144, %s394, [#allocation9], 128, 128, 8
        $region32: #{tpu_custom_call.1} parent=11 // pred_fallthru
          _
        // Predicated region
        $region33: #{tpu_custom_call.1} parent=11 // pred_check
          %p400 = pneg %p206
        $region34: #{tpu_custom_call.1} parent=11 // pred_check_branch
          %402 = sbr.rel (%p400) target = $region36
        $region35: #{tpu_custom_call.1} parent=11 // pred_region
          _
        $region36: #{tpu_custom_call.1} parent=11 // pred_fallthru
          _
        // Predicated region
        $region37: #{tpu_custom_call.1} parent=11 // pred_check
          %p403 = pneg %p227
        $region38: #{tpu_custom_call.1} parent=11 // pred_check_branch
          %405 = sbr.rel (%p403) target = $region40
        $region39: #{tpu_custom_call.1} parent=11 // pred_region
          %407 = vsyncadd [#allocation9], 0
          %s408 = sshll.u32 %s8, 4
          %s409 = int_to_ptr.hbm [resolvable:$true] %s408
          %s410 = sshll.u32 [#allocation10], 4
          %s411 = int_to_ptr.vmem [resolvable:$true] %s410
          %416 = dma.hbm_to_vmem [thread:$0]  %s409, 6144, %s411, [#allocation9], 128, 128, 8
        $region40: #{tpu_custom_call.1} parent=11 // pred_fallthru
          _
        // Predicated region
        $region41: #{tpu_custom_call.1} parent=11 // pred_check
          %p417 = pneg %p248
        $region42: #{tpu_custom_call.1} parent=11 // pred_check_branch
          %419 = sbr.rel (%p417) target = $region44
        $region43: #{tpu_custom_call.1} parent=11 // pred_region
          _
        $region44: #{tpu_custom_call.1} parent=11 // pred_fallthru
          _
        // Predicated region
        $region45: #{tpu_custom_call.1} parent=11 // pred_check
          %p420 = pneg %p269
        $region46: #{tpu_custom_call.1} parent=11 // pred_check_branch
          %422 = sbr.rel (%p420) target = $region48
        $region47: #{tpu_custom_call.1} parent=11 // pred_region
          %424 = vsyncadd [#allocation12], 0
          %s425 = sshll.u32 %s10, 4
          %s426 = int_to_ptr.hbm [resolvable:$true] %s425
          %s427 = sshll.u32 [#allocation11], 4
          %s428 = int_to_ptr.vmem [resolvable:$true] %s427
          %433 = dma.hbm_to_vmem [thread:$0]  %s426, 4096, %s428, [#allocation12], 256, 256, 16
        $region48: #{tpu_custom_call.1} parent=11 // pred_fallthru
          _
        // Predicated region
        $region49: #{tpu_custom_call.1} parent=11 // pred_check
          %p434 = pneg %p290
        $region50: #{tpu_custom_call.1} parent=11 // pred_check_branch
          %436 = sbr.rel (%p434) target = $region52
        $region51: #{tpu_custom_call.1} parent=11 // pred_region
          _
        $region52: #{tpu_custom_call.1} parent=11 // pred_fallthru
          _
        // Predicated region
        $region53: #{tpu_custom_call.1} parent=11 // pred_check
          %p437 = pneg %p311
        $region54: #{tpu_custom_call.1} parent=11 // pred_check_branch
          %439 = sbr.rel (%p437) target = $region56
        $region55: #{tpu_custom_call.1} parent=11 // pred_region
          _
        $region56: #{tpu_custom_call.1} parent=11 // pred_fallthru
          _
      $region12: #{tpu_custom_call.1} parent=5 // pred_fallthru
        _
      %p440 = scmp.lt.s32.totalorder %s28, 2
      // Predicated region
      $region57: #{tpu_custom_call.1} parent=5 // pred_check
        %p441 = pneg %p440
      $region58: #{tpu_custom_call.1} parent=5 // pred_check_branch
        %443 = sbr.rel (%p441) target = $region60
      $region59: #{tpu_custom_call.1} parent=5 // pred_region
        // Predicated region
        $region61: #{tpu_custom_call.1} parent=59 // pred_check
          %p444 = pneg %p48
        $region62: #{tpu_custom_call.1} parent=59 // pred_check_branch
          %446 = sbr.rel (%p444) target = $region64
        $region63: #{tpu_custom_call.1} parent=59 // pred_region
          %p447 = scmp.lt.s32.totalorder %s28, 1
          %s448 = scalar_select %p447, %s28, 1
          %s449 = smul.addr %s448, 2
          %s450 = smul.addr %s449, 8
          %s451 = scalar_lea.vmem %s0, %s450
        $region64: #{tpu_custom_call.1} parent=59 // pred_fallthru
          _
        // Predicated region
        $region65: #{tpu_custom_call.1} parent=59 // pred_check
          %p452 = pneg %p74
        $region66: #{tpu_custom_call.1} parent=59 // pred_check_branch
          %454 = sbr.rel (%p452) target = $region68
        $region67: #{tpu_custom_call.1} parent=59 // pred_region
          %s455 = sand.u32 %s64, 1
          %s456 = scalar_lea.sflag [#allocation3], %s455
          %s457 = sand.u32 %s64, 1
          %s458 = smul.addr %s457, 16
          %s459 = scalar_lea.vmem [#allocation2], %s458
          %461 = vsyncadd %s456, 0
          %s462 = smul.addr %s28, 2
          %s463 = smul.addr %s462, 8
          %s464 = scalar_lea.hbm %s1, %s463
          %s465 = sshll.u32 %s464, 4
          %s466 = int_to_ptr.hbm [resolvable:$true] %s465
          %s467 = sshll.u32 %s459, 4
          %s468 = int_to_ptr.vmem [resolvable:$true] %s467
          %473 = dma.hbm_to_vmem [thread:$0]  %s466, 256, %s468, %s456, 128, 128, 8
        $region68: #{tpu_custom_call.1} parent=59 // pred_fallthru
          _
      $region60: #{tpu_custom_call.1} parent=5 // pred_fallthru
        _
      %p474 = scmp.le.s32.totalorder 1, %s28
      %p475 = scmp.lt.s32.totalorder %s28, 3
      %p476 = pnand %p474, %p475
      %p477 = pneg %p476
      // Predicated region
      $region69: #{tpu_custom_call.1} parent=5 // pred_check
        _
      $region70: #{tpu_custom_call.1} parent=5 // pred_check_branch
        %479 = sbr.rel (%p476) target = $region72
      $region71: #{tpu_custom_call.1} parent=5 // pred_region
        %s480 = ssub.s32 %s28, 1
        %s481 = sand.u32 %s67, 1
        %s482 = scalar_lea.sflag [#allocation3], %s481
        %s483 = sand.u32 %s67, 1
        %s484 = smul.addr %s483, 16
        %s485 = scalar_lea.vmem [#allocation2], %s484
        // Predicated region
        $region73: #{tpu_custom_call.1} parent=71 // pred_check
          %p486 = pneg %p80
        $region74: #{tpu_custom_call.1} parent=71 // pred_check_branch
          %488 = sbr.rel (%p486) target = $region76
        $region75: #{tpu_custom_call.1} parent=71 // pred_region
          %490 = dma.done %s482, 256
        $region76: #{tpu_custom_call.1} parent=71 // pred_fallthru
          _
        // Predicated region
        $region77: #{tpu_custom_call.1} parent=71 // pred_check
          %p491 = pneg %p101
        $region78: #{tpu_custom_call.1} parent=71 // pred_check_branch
          %493 = sbr.rel (%p491) target = $region80
        $region79: #{tpu_custom_call.1} parent=71 // pred_region
          %495 = dma.done [#allocation6], 6144
        $region80: #{tpu_custom_call.1} parent=71 // pred_fallthru
          _
        // Predicated region
        $region81: #{tpu_custom_call.1} parent=71 // pred_check
          %p496 = pneg %p143
        $region82: #{tpu_custom_call.1} parent=71 // pred_check_branch
          %498 = sbr.rel (%p496) target = $region84
        $region83: #{tpu_custom_call.1} parent=71 // pred_region
          %500 = dma.done [#allocation6], 6144
        $region84: #{tpu_custom_call.1} parent=71 // pred_fallthru
          _
        // Predicated region
        $region85: #{tpu_custom_call.1} parent=71 // pred_check
          %p501 = pneg %p185
        $region86: #{tpu_custom_call.1} parent=71 // pred_check_branch
          %503 = sbr.rel (%p501) target = $region88
        $region87: #{tpu_custom_call.1} parent=71 // pred_region
          %505 = dma.done [#allocation9], 6144
        $region88: #{tpu_custom_call.1} parent=71 // pred_fallthru
          _
        // Predicated region
        $region89: #{tpu_custom_call.1} parent=71 // pred_check
          %p506 = pneg %p227
        $region90: #{tpu_custom_call.1} parent=71 // pred_check_branch
          %508 = sbr.rel (%p506) target = $region92
        $region91: #{tpu_custom_call.1} parent=71 // pred_region
          %510 = dma.done [#allocation9], 6144
        $region92: #{tpu_custom_call.1} parent=71 // pred_fallthru
          _
        // Predicated region
        $region93: #{tpu_custom_call.1} parent=71 // pred_check
          %p511 = pneg %p269
        $region94: #{tpu_custom_call.1} parent=71 // pred_check_branch
          %513 = sbr.rel (%p511) target = $region96
        $region95: #{tpu_custom_call.1} parent=71 // pred_region
          %515 = dma.done [#allocation12], 4096
        $region96: #{tpu_custom_call.1} parent=71 // pred_fallthru
          _
        %p516 = scmp.lt.s32.totalorder %s33, 1
        %s517 = scalar_select %p516, %s33, 1
        %s518 = smul.addr %s517, 2
        %s519 = smul.addr %s518, 8
        %s520 = scalar_lea.vmem %s0, %s519
        %p521 = pneg %p54
        %p522 = pneg %p51
        %s523 = sand.u32 %s67, 1
        %s524 = scalar_lea.sflag [#allocation3], %s523
        %s525 = sand.u32 %s67, 1
        %s526 = smul.addr %s525, 16
        %s527 = scalar_lea.vmem [#allocation2], %s526
        %p528 = pneg %p80
        %p529 = pneg %p77
        %p530 = pneg %p101
        %p531 = pneg %p98
        %p532 = pneg %p122
        %p533 = pneg %p119
        %p534 = pneg %p143
        %p535 = pneg %p140
        %p536 = pneg %p164
        %p537 = pneg %p161
        %p538 = pneg %p185
        %p539 = pneg %p182
        %p540 = pneg %p206
        %p541 = pneg %p203
        %p542 = pneg %p227
        %p543 = pneg %p224
        %p544 = pneg %p248
        %p545 = pneg %p245
        %p546 = pneg %p269
        %p547 = pneg %p266
        %p548 = pneg %p290
        %p549 = pneg %p287
        %p550 = pneg %p311
        %p551 = pneg %p308
        %p552 = pneg %p337
        %p553 = pneg %p334
        %s554 = sand.u32 %s324, 1
        %s555 = scalar_lea.sflag [#allocation4], %s554
        %s556 = sand.u32 %s324, 1
        %s557 = smul.addr %s556, 64
        %s558 = scalar_lea.vmem [#allocation13], %s557
        %p559 = scmp.lt.s32.totalorder %s33, 1
        %s560 = scalar_select %p559, %s33, 1
        %s561 = smul.addr %s560, 2
        %s562 = smul.addr %s561, 8
        %s563 = scalar_lea.vmem %s0, %s562
        %v564 = vld [vmem:[%s563] sm:$0xff]
        %v565 = vld [vmem:[%s563 + $0x8] sm:$0xff]
        %v566 = vld [vmem:[%s485] sm:$0xff]
        %v567 = vld [vmem:[%s485 + $0x8] sm:$0xff]
        %v568 = vlaneseq
        %v569 = vshrl.u32 %v568, 7
        %v570 = vadd.s32 %v569, 8
        %v571 = vmax.f32 %v566, 0.0
        %v572 = vmax.f32 %v567, 0.0
        %v573 = vrot.slane %v571, 7
        %v574 = vrot.slane %v572, 7
        %vm575 = vcmp.lt.s32.totalorder %v569, 1
        %v576 = vsel %vm575, %v573, %v574
        %v577 = vsel %vm575, %v574, %v573
        %vm578 = vcmp.ge.s32.totalorder %v569, 1
        %vm579 = vcmp.ge.s32.totalorder %v570, 1
        %v580 = vsel %vm578, %v577, 0.0
        %v581 = vsel %vm579, %v576, 0.0
        %v582 = vrot.slane %v571, 1
        %v583 = vrot.slane %v572, 1
        %vm584 = vcmp.lt.s32.totalorder %v569, 7
        %v585 = vsel %vm584, %v582, %v583
        %v586 = vsel %vm584, %v583, %v582
        %vm587 = vcmp.lt.s32.totalorder %v569, 15
        %vm588 = vcmp.lt.s32.totalorder %v570, 15
        %v589 = vsel %vm587, %v585, 0.0
        %v590 = vsel %vm588, %v586, 0.0
        %v591 = vld [vmem:[#allocation5] sm:$0xff]
        %v592 = vld [vmem:[#allocation5 + $0x8] sm:$0xff]
        %v593 = vld [vmem:[#allocation5 + $0x10] sm:$0xff]
        %v594 = vld [vmem:[#allocation5 + $0x18] sm:$0xff]
        %v595 = vld [vmem:[#allocation5 + $0x20] sm:$0xff]
        %v596 = vld [vmem:[#allocation5 + $0x28] sm:$0xff]
        %v597 = vld [vmem:[#allocation5 + $0x30] sm:$0xff]
        %v598 = vld [vmem:[#allocation5 + $0x38] sm:$0xff]
        %v599 = vld [vmem:[#allocation5 + $0x40] sm:$0xff]
        %v600 = vld [vmem:[#allocation5 + $0x48] sm:$0xff]
        %v601 = vld [vmem:[#allocation5 + $0x50] sm:$0xff]
        %v602 = vld [vmem:[#allocation5 + $0x58] sm:$0xff]
        %v603 = vld [vmem:[#allocation5 + $0x60] sm:$0xff]
        %v604 = vld [vmem:[#allocation5 + $0x68] sm:$0xff]
        %v605 = vld [vmem:[#allocation5 + $0x70] sm:$0xff]
        %v606 = vld [vmem:[#allocation5 + $0x78] sm:$0xff]
        %v607 = vld [vmem:[#allocation5 + $0x80] sm:$0xff]
        %v608 = vld [vmem:[#allocation5 + $0x88] sm:$0xff]
        %v609 = vld [vmem:[#allocation5 + $0x90] sm:$0xff]
        %v610 = vld [vmem:[#allocation5 + $0x98] sm:$0xff]
        %v611 = vld [vmem:[#allocation5 + $0xa0] sm:$0xff]
        %v612 = vld [vmem:[#allocation5 + $0xa8] sm:$0xff]
        %v613 = vld [vmem:[#allocation5 + $0xb0] sm:$0xff]
        %v614 = vld [vmem:[#allocation5 + $0xb8] sm:$0xff]
        %v615 = vld [vmem:[#allocation5 + $0xc0] sm:$0xff]
        %v616 = vld [vmem:[#allocation5 + $0xc8] sm:$0xff]
        %v617 = vld [vmem:[#allocation5 + $0xd0] sm:$0xff]
        %v618 = vld [vmem:[#allocation5 + $0xd8] sm:$0xff]
        %v619 = vld [vmem:[#allocation5 + $0xe0] sm:$0xff]
        %v620 = vld [vmem:[#allocation5 + $0xe8] sm:$0xff]
        %v621 = vld [vmem:[#allocation5 + $0xf0] sm:$0xff]
        %v622 = vld [vmem:[#allocation5 + $0xf8] sm:$0xff]
        %v623 = vld [vmem:[#allocation5 + $0x100] sm:$0xff]
        %v624 = vld [vmem:[#allocation5 + $0x108] sm:$0xff]
        %v625 = vld [vmem:[#allocation5 + $0x110] sm:$0xff]
        %v626 = vld [vmem:[#allocation5 + $0x118] sm:$0xff]
        %v627 = vld [vmem:[#allocation5 + $0x120] sm:$0xff]
        %v628 = vld [vmem:[#allocation5 + $0x128] sm:$0xff]
        %v629 = vld [vmem:[#allocation5 + $0x130] sm:$0xff]
        %v630 = vld [vmem:[#allocation5 + $0x138] sm:$0xff]
        %v631 = vld [vmem:[#allocation5 + $0x140] sm:$0xff]
        %v632 = vld [vmem:[#allocation5 + $0x148] sm:$0xff]
        %v633 = vld [vmem:[#allocation5 + $0x150] sm:$0xff]
        %v634 = vld [vmem:[#allocation5 + $0x158] sm:$0xff]
        %v635 = vld [vmem:[#allocation5 + $0x160] sm:$0xff]
        %v636 = vld [vmem:[#allocation5 + $0x168] sm:$0xff]
        %v637 = vld [vmem:[#allocation5 + $0x170] sm:$0xff]
        %v638 = vld [vmem:[#allocation5 + $0x178] sm:$0xff]
        %v639 = vld [vmem:[%s3] sm:$0x1]
        %v641 = vperm.slane %v639, 0
        %643 = vmatpush.msra.mxu0 %v606
        %644 = vmatpush.msra.mxu0 %v605
        %645 = vmatpush.msra.mxu0 %v604
        %646 = vmatpush.msra.mxu0 %v603
        %647 = vmatpush.msra.mxu0 %v602
        %648 = vmatpush.msra.mxu0 %v601
        %649 = vmatpush.msra.mxu0 %v600
        %650 = vmatpush.msra.mxu0 %v599
        %651 = vmatpush.msra.mxu0 %v598
        %652 = vmatpush.msra.mxu0 %v597
        %653 = vmatpush.msra.mxu0 %v596
        %654 = vmatpush.msra.mxu0 %v595
        %655 = vmatpush.msra.mxu0 %v594
        %656 = vmatpush.msra.mxu0 %v593
        %657 = vmatpush.msra.mxu0 %v592
        %658 = vmatpush.msra.mxu0 %v591
        %659 = vmatmul.f32.gmra.mxu0 %v580
        %v660 = vpop.f32.mrf.mxu0
        %v661 = vadd.f32 %v641, %v660
        %662 = vmatmul.f32.gmra.mxu0 %v581
        %v663 = vpop.f32.mrf.mxu0
        %v664 = vadd.f32 %v641, %v663
        %665 = vdwg.mxu0
        %666 = vmatpush.msra.mxu0 %v622
        %667 = vmatpush.msra.mxu0 %v621
        %668 = vmatpush.msra.mxu0 %v620
        %669 = vmatpush.msra.mxu0 %v619
        %670 = vmatpush.msra.mxu0 %v618
        %671 = vmatpush.msra.mxu0 %v617
        %672 = vmatpush.msra.mxu0 %v616
        %673 = vmatpush.msra.mxu0 %v615
        %674 = vmatpush.msra.mxu0 %v614
        %675 = vmatpush.msra.mxu0 %v613
        %676 = vmatpush.msra.mxu0 %v612
        %677 = vmatpush.msra.mxu0 %v611
        %678 = vmatpush.msra.mxu0 %v610
        %679 = vmatpush.msra.mxu0 %v609
        %680 = vmatpush.msra.mxu0 %v608
        %681 = vmatpush.msra.mxu0 %v607
        %682 = vmatmul.f32.gmra.mxu0 %v571
        %v683 = vpop.f32.mrf.mxu0
        %v684 = vadd.f32 %v661, %v683
        %685 = vmatmul.f32.gmra.mxu0 %v572
        %v686 = vpop.f32.mrf.mxu0
        %v687 = vadd.f32 %v664, %v686
        %688 = vdwg.mxu0
        %689 = vmatpush.msra.mxu0 %v638
        %690 = vmatpush.msra.mxu0 %v637
        %691 = vmatpush.msra.mxu0 %v636
        %692 = vmatpush.msra.mxu0 %v635
        %693 = vmatpush.msra.mxu0 %v634
        %694 = vmatpush.msra.mxu0 %v633
        %695 = vmatpush.msra.mxu0 %v632
        %696 = vmatpush.msra.mxu0 %v631
        %697 = vmatpush.msra.mxu0 %v630
        %698 = vmatpush.msra.mxu0 %v629
        %699 = vmatpush.msra.mxu0 %v628
        %700 = vmatpush.msra.mxu0 %v627
        %701 = vmatpush.msra.mxu0 %v626
        %702 = vmatpush.msra.mxu0 %v625
        %703 = vmatpush.msra.mxu0 %v624
        %704 = vmatpush.msra.mxu0 %v623
        %705 = vmatmul.f32.gmra.mxu0 %v589
        %v706 = vpop.f32.mrf.mxu0
        %v707 = vadd.f32 %v684, %v706
        %708 = vmatmul.f32.gmra.mxu0 %v590
        %v709 = vpop.f32.mrf.mxu0
        %v710 = vadd.f32 %v687, %v709
        %711 = vdwg.mxu0
        %v712 = vmax.f32 %v707, 0.0
        %v713 = vmax.f32 %v710, 0.0
        %v714 = vrot.slane %v712, 7
        %v715 = vrot.slane %v713, 7
        %v716 = vsel %vm575, %v714, %v715
        %v717 = vsel %vm575, %v715, %v714
        %v718 = vsel %vm578, %v717, 0.0
        %v719 = vsel %vm579, %v716, 0.0
        %v720 = vrot.slane %v712, 1
        %v721 = vrot.slane %v713, 1
        %v722 = vsel %vm584, %v720, %v721
        %v723 = vsel %vm584, %v721, %v720
        %v724 = vsel %vm587, %v722, 0.0
        %v725 = vsel %vm588, %v723, 0.0
        %v726 = vld [vmem:[#allocation7] sm:$0xff]
        %v727 = vld [vmem:[#allocation7 + $0x8] sm:$0xff]
        %v728 = vld [vmem:[#allocation7 + $0x10] sm:$0xff]
        %v729 = vld [vmem:[#allocation7 + $0x18] sm:$0xff]
        %v730 = vld [vmem:[#allocation7 + $0x20] sm:$0xff]
        %v731 = vld [vmem:[#allocation7 + $0x28] sm:$0xff]
        %v732 = vld [vmem:[#allocation7 + $0x30] sm:$0xff]
        %v733 = vld [vmem:[#allocation7 + $0x38] sm:$0xff]
        %v734 = vld [vmem:[#allocation7 + $0x40] sm:$0xff]
        %v735 = vld [vmem:[#allocation7 + $0x48] sm:$0xff]
        %v736 = vld [vmem:[#allocation7 + $0x50] sm:$0xff]
        %v737 = vld [vmem:[#allocation7 + $0x58] sm:$0xff]
        %v738 = vld [vmem:[#allocation7 + $0x60] sm:$0xff]
        %v739 = vld [vmem:[#allocation7 + $0x68] sm:$0xff]
        %v740 = vld [vmem:[#allocation7 + $0x70] sm:$0xff]
        %v741 = vld [vmem:[#allocation7 + $0x78] sm:$0xff]
        %v742 = vld [vmem:[#allocation7 + $0x80] sm:$0xff]
        %v743 = vld [vmem:[#allocation7 + $0x88] sm:$0xff]
        %v744 = vld [vmem:[#allocation7 + $0x90] sm:$0xff]
        %v745 = vld [vmem:[#allocation7 + $0x98] sm:$0xff]
        %v746 = vld [vmem:[#allocation7 + $0xa0] sm:$0xff]
        %v747 = vld [vmem:[#allocation7 + $0xa8] sm:$0xff]
        %v748 = vld [vmem:[#allocation7 + $0xb0] sm:$0xff]
        %v749 = vld [vmem:[#allocation7 + $0xb8] sm:$0xff]
        %v750 = vld [vmem:[#allocation7 + $0xc0] sm:$0xff]
        %v751 = vld [vmem:[#allocation7 + $0xc8] sm:$0xff]
        %v752 = vld [vmem:[#allocation7 + $0xd0] sm:$0xff]
        %v753 = vld [vmem:[#allocation7 + $0xd8] sm:$0xff]
        %v754 = vld [vmem:[#allocation7 + $0xe0] sm:$0xff]
        %v755 = vld [vmem:[#allocation7 + $0xe8] sm:$0xff]
        %v756 = vld [vmem:[#allocation7 + $0xf0] sm:$0xff]
        %v757 = vld [vmem:[#allocation7 + $0xf8] sm:$0xff]
        %v758 = vld [vmem:[#allocation7 + $0x100] sm:$0xff]
        %v759 = vld [vmem:[#allocation7 + $0x108] sm:$0xff]
        %v760 = vld [vmem:[#allocation7 + $0x110] sm:$0xff]
        %v761 = vld [vmem:[#allocation7 + $0x118] sm:$0xff]
        %v762 = vld [vmem:[#allocation7 + $0x120] sm:$0xff]
        %v763 = vld [vmem:[#allocation7 + $0x128] sm:$0xff]
        %v764 = vld [vmem:[#allocation7 + $0x130] sm:$0xff]
        %v765 = vld [vmem:[#allocation7 + $0x138] sm:$0xff]
        %v766 = vld [vmem:[#allocation7 + $0x140] sm:$0xff]
        %v767 = vld [vmem:[#allocation7 + $0x148] sm:$0xff]
        %v768 = vld [vmem:[#allocation7 + $0x150] sm:$0xff]
        %v769 = vld [vmem:[#allocation7 + $0x158] sm:$0xff]
        %v770 = vld [vmem:[#allocation7 + $0x160] sm:$0xff]
        %v771 = vld [vmem:[#allocation7 + $0x168] sm:$0xff]
        %v772 = vld [vmem:[#allocation7 + $0x170] sm:$0xff]
        %v773 = vld [vmem:[#allocation7 + $0x178] sm:$0xff]
        %v774 = vld [vmem:[%s5] sm:$0x1]
        %v776 = vperm.slane %v774, 0
        %778 = vmatpush.msra.mxu0 %v741
        %779 = vmatpush.msra.mxu0 %v740
        %780 = vmatpush.msra.mxu0 %v739
        %781 = vmatpush.msra.mxu0 %v738
        %782 = vmatpush.msra.mxu0 %v737
        %783 = vmatpush.msra.mxu0 %v736
        %784 = vmatpush.msra.mxu0 %v735
        %785 = vmatpush.msra.mxu0 %v734
        %786 = vmatpush.msra.mxu0 %v733
        %787 = vmatpush.msra.mxu0 %v732
        %788 = vmatpush.msra.mxu0 %v731
        %789 = vmatpush.msra.mxu0 %v730
        %790 = vmatpush.msra.mxu0 %v729
        %791 = vmatpush.msra.mxu0 %v728
        %792 = vmatpush.msra.mxu0 %v727
        %793 = vmatpush.msra.mxu0 %v726
        %794 = vmatmul.f32.gmra.mxu0 %v718
        %v795 = vpop.f32.mrf.mxu0
        %v796 = vadd.f32 %v776, %v795
        %797 = vmatmul.f32.gmra.mxu0 %v719
        %v798 = vpop.f32.mrf.mxu0
        %v799 = vadd.f32 %v776, %v798
        %800 = vdwg.mxu0
        %801 = vmatpush.msra.mxu0 %v757
        %802 = vmatpush.msra.mxu0 %v756
        %803 = vmatpush.msra.mxu0 %v755
        %804 = vmatpush.msra.mxu0 %v754
        %805 = vmatpush.msra.mxu0 %v753
        %806 = vmatpush.msra.mxu0 %v752
        %807 = vmatpush.msra.mxu0 %v751
        %808 = vmatpush.msra.mxu0 %v750
        %809 = vmatpush.msra.mxu0 %v749
        %810 = vmatpush.msra.mxu0 %v748
        %811 = vmatpush.msra.mxu0 %v747
        %812 = vmatpush.msra.mxu0 %v746
        %813 = vmatpush.msra.mxu0 %v745
        %814 = vmatpush.msra.mxu0 %v744
        %815 = vmatpush.msra.mxu0 %v743
        %816 = vmatpush.msra.mxu0 %v742
        %817 = vmatmul.f32.gmra.mxu0 %v712
        %v818 = vpop.f32.mrf.mxu0
        %v819 = vadd.f32 %v796, %v818
        %820 = vmatmul.f32.gmra.mxu0 %v713
        %v821 = vpop.f32.mrf.mxu0
        %v822 = vadd.f32 %v799, %v821
        %823 = vdwg.mxu0
        %824 = vmatpush.msra.mxu0 %v773
        %825 = vmatpush.msra.mxu0 %v772
        %826 = vmatpush.msra.mxu0 %v771
        %827 = vmatpush.msra.mxu0 %v770
        %828 = vmatpush.msra.mxu0 %v769
        %829 = vmatpush.msra.mxu0 %v768
        %830 = vmatpush.msra.mxu0 %v767
        %831 = vmatpush.msra.mxu0 %v766
        %832 = vmatpush.msra.mxu0 %v765
        %833 = vmatpush.msra.mxu0 %v764
        %834 = vmatpush.msra.mxu0 %v763
        %835 = vmatpush.msra.mxu0 %v762
        %836 = vmatpush.msra.mxu0 %v761
        %837 = vmatpush.msra.mxu0 %v760
        %838 = vmatpush.msra.mxu0 %v759
        %839 = vmatpush.msra.mxu0 %v758
        %840 = vmatmul.f32.gmra.mxu0 %v724
        %v841 = vpop.f32.mrf.mxu0
        %v842 = vadd.f32 %v819, %v841
        %843 = vmatmul.f32.gmra.mxu0 %v725
        %v844 = vpop.f32.mrf.mxu0
        %v845 = vadd.f32 %v822, %v844
        %846 = vdwg.mxu0
        %v847 = vadd.f32 %v842, %v566
        %v848 = vadd.f32 %v845, %v567
        %v849 = vadd.f32 %v564, %v847
        %v850 = vadd.f32 %v565, %v848
        %v851 = vmax.f32 %v849, 0.0
        %v852 = vmax.f32 %v850, 0.0
        %v853 = vrot.slane %v851, 7
        %v854 = vrot.slane %v852, 7
        %v855 = vsel %vm575, %v853, %v854
        %v856 = vsel %vm575, %v854, %v853
        %v857 = vsel %vm578, %v856, 0.0
        %v858 = vsel %vm579, %v855, 0.0
        %v859 = vrot.slane %v851, 1
        %v860 = vrot.slane %v852, 1
        %v861 = vsel %vm584, %v859, %v860
        %v862 = vsel %vm584, %v860, %v859
        %v863 = vsel %vm587, %v861, 0.0
        %v864 = vsel %vm588, %v862, 0.0
        %v865 = vld [vmem:[#allocation8] sm:$0xff]
        %v866 = vld [vmem:[#allocation8 + $0x8] sm:$0xff]
        %v867 = vld [vmem:[#allocation8 + $0x10] sm:$0xff]
        %v868 = vld [vmem:[#allocation8 + $0x18] sm:$0xff]
        %v869 = vld [vmem:[#allocation8 + $0x20] sm:$0xff]
        %v870 = vld [vmem:[#allocation8 + $0x28] sm:$0xff]
        %v871 = vld [vmem:[#allocation8 + $0x30] sm:$0xff]
        %v872 = vld [vmem:[#allocation8 + $0x38] sm:$0xff]
        %v873 = vld [vmem:[#allocation8 + $0x40] sm:$0xff]
        %v874 = vld [vmem:[#allocation8 + $0x48] sm:$0xff]
        %v875 = vld [vmem:[#allocation8 + $0x50] sm:$0xff]
        %v876 = vld [vmem:[#allocation8 + $0x58] sm:$0xff]
        %v877 = vld [vmem:[#allocation8 + $0x60] sm:$0xff]
        %v878 = vld [vmem:[#allocation8 + $0x68] sm:$0xff]
        %v879 = vld [vmem:[#allocation8 + $0x70] sm:$0xff]
        %v880 = vld [vmem:[#allocation8 + $0x78] sm:$0xff]
        %v881 = vld [vmem:[#allocation8 + $0x80] sm:$0xff]
        %v882 = vld [vmem:[#allocation8 + $0x88] sm:$0xff]
        %v883 = vld [vmem:[#allocation8 + $0x90] sm:$0xff]
        %v884 = vld [vmem:[#allocation8 + $0x98] sm:$0xff]
        %v885 = vld [vmem:[#allocation8 + $0xa0] sm:$0xff]
        %v886 = vld [vmem:[#allocation8 + $0xa8] sm:$0xff]
        %v887 = vld [vmem:[#allocation8 + $0xb0] sm:$0xff]
        %v888 = vld [vmem:[#allocation8 + $0xb8] sm:$0xff]
        %v889 = vld [vmem:[#allocation8 + $0xc0] sm:$0xff]
        %v890 = vld [vmem:[#allocation8 + $0xc8] sm:$0xff]
        %v891 = vld [vmem:[#allocation8 + $0xd0] sm:$0xff]
        %v892 = vld [vmem:[#allocation8 + $0xd8] sm:$0xff]
        %v893 = vld [vmem:[#allocation8 + $0xe0] sm:$0xff]
        %v894 = vld [vmem:[#allocation8 + $0xe8] sm:$0xff]
        %v895 = vld [vmem:[#allocation8 + $0xf0] sm:$0xff]
        %v896 = vld [vmem:[#allocation8 + $0xf8] sm:$0xff]
        %v897 = vld [vmem:[#allocation8 + $0x100] sm:$0xff]
        %v898 = vld [vmem:[#allocation8 + $0x108] sm:$0xff]
        %v899 = vld [vmem:[#allocation8 + $0x110] sm:$0xff]
        %v900 = vld [vmem:[#allocation8 + $0x118] sm:$0xff]
        %v901 = vld [vmem:[#allocation8 + $0x120] sm:$0xff]
        %v902 = vld [vmem:[#allocation8 + $0x128] sm:$0xff]
        %v903 = vld [vmem:[#allocation8 + $0x130] sm:$0xff]
        %v904 = vld [vmem:[#allocation8 + $0x138] sm:$0xff]
        %v905 = vld [vmem:[#allocation8 + $0x140] sm:$0xff]
        %v906 = vld [vmem:[#allocation8 + $0x148] sm:$0xff]
        %v907 = vld [vmem:[#allocation8 + $0x150] sm:$0xff]
        %v908 = vld [vmem:[#allocation8 + $0x158] sm:$0xff]
        %v909 = vld [vmem:[#allocation8 + $0x160] sm:$0xff]
        %v910 = vld [vmem:[#allocation8 + $0x168] sm:$0xff]
        %v911 = vld [vmem:[#allocation8 + $0x170] sm:$0xff]
        %v912 = vld [vmem:[#allocation8 + $0x178] sm:$0xff]
        %v913 = vld [vmem:[%s7] sm:$0x1]
        %v915 = vperm.slane %v913, 0
        %917 = vmatpush.msra.mxu0 %v880
        %918 = vmatpush.msra.mxu0 %v879
        %919 = vmatpush.msra.mxu0 %v878
        %920 = vmatpush.msra.mxu0 %v877
        %921 = vmatpush.msra.mxu0 %v876
        %922 = vmatpush.msra.mxu0 %v875
        %923 = vmatpush.msra.mxu0 %v874
        %924 = vmatpush.msra.mxu0 %v873
        %925 = vmatpush.msra.mxu0 %v872
        %926 = vmatpush.msra.mxu0 %v871
        %927 = vmatpush.msra.mxu0 %v870
        %928 = vmatpush.msra.mxu0 %v869
        %929 = vmatpush.msra.mxu0 %v868
        %930 = vmatpush.msra.mxu0 %v867
        %931 = vmatpush.msra.mxu0 %v866
        %932 = vmatpush.msra.mxu0 %v865
        %933 = vmatmul.f32.gmra.mxu0 %v857
        %v934 = vpop.f32.mrf.mxu0
        %v935 = vadd.f32 %v915, %v934
        %936 = vmatmul.f32.gmra.mxu0 %v858
        %v937 = vpop.f32.mrf.mxu0
        %v938 = vadd.f32 %v915, %v937
        %939 = vdwg.mxu0
        %940 = vmatpush.msra.mxu0 %v896
        %941 = vmatpush.msra.mxu0 %v895
        %942 = vmatpush.msra.mxu0 %v894
        %943 = vmatpush.msra.mxu0 %v893
        %944 = vmatpush.msra.mxu0 %v892
        %945 = vmatpush.msra.mxu0 %v891
        %946 = vmatpush.msra.mxu0 %v890
        %947 = vmatpush.msra.mxu0 %v889
        %948 = vmatpush.msra.mxu0 %v888
        %949 = vmatpush.msra.mxu0 %v887
        %950 = vmatpush.msra.mxu0 %v886
        %951 = vmatpush.msra.mxu0 %v885
        %952 = vmatpush.msra.mxu0 %v884
        %953 = vmatpush.msra.mxu0 %v883
        %954 = vmatpush.msra.mxu0 %v882
        %955 = vmatpush.msra.mxu0 %v881
        %956 = vmatmul.f32.gmra.mxu0 %v851
        %v957 = vpop.f32.mrf.mxu0
        %v958 = vadd.f32 %v935, %v957
        %959 = vmatmul.f32.gmra.mxu0 %v852
        %v960 = vpop.f32.mrf.mxu0
        %v961 = vadd.f32 %v938, %v960
        %962 = vdwg.mxu0
        %963 = vmatpush.msra.mxu0 %v912
        %964 = vmatpush.msra.mxu0 %v911
        %965 = vmatpush.msra.mxu0 %v910
        %966 = vmatpush.msra.mxu0 %v909
        %967 = vmatpush.msra.mxu0 %v908
        %968 = vmatpush.msra.mxu0 %v907
        %969 = vmatpush.msra.mxu0 %v906
        %970 = vmatpush.msra.mxu0 %v905
        %971 = vmatpush.msra.mxu0 %v904
        %972 = vmatpush.msra.mxu0 %v903
        %973 = vmatpush.msra.mxu0 %v902
        %974 = vmatpush.msra.mxu0 %v901
        %975 = vmatpush.msra.mxu0 %v900
        %976 = vmatpush.msra.mxu0 %v899
        %977 = vmatpush.msra.mxu0 %v898
        %978 = vmatpush.msra.mxu0 %v897
        %979 = vmatmul.f32.gmra.mxu0 %v863
        %v980 = vpop.f32.mrf.mxu0
        %v981 = vadd.f32 %v958, %v980
        %982 = vmatmul.f32.gmra.mxu0 %v864
        %v983 = vpop.f32.mrf.mxu0
        %v984 = vadd.f32 %v961, %v983
        %985 = vdwg.mxu0
        %v986 = vmax.f32 %v981, 0.0
        %v987 = vmax.f32 %v984, 0.0
        %v988 = vrot.slane %v986, 7
        %v989 = vrot.slane %v987, 7
        %v990 = vsel %vm575, %v988, %v989
        %v991 = vsel %vm575, %v989, %v988
        %v992 = vsel %vm578, %v991, 0.0
        %v993 = vsel %vm579, %v990, 0.0
        %v994 = vrot.slane %v986, 1
        %v995 = vrot.slane %v987, 1
        %v996 = vsel %vm584, %v994, %v995
        %v997 = vsel %vm584, %v995, %v994
        %v998 = vsel %vm587, %v996, 0.0
        %v999 = vsel %vm588, %v997, 0.0
        %v1000 = vld [vmem:[#allocation10] sm:$0xff]
        %v1001 = vld [vmem:[#allocation10 + $0x8] sm:$0xff]
        %v1002 = vld [vmem:[#allocation10 + $0x10] sm:$0xff]
        %v1003 = vld [vmem:[#allocation10 + $0x18] sm:$0xff]
        %v1004 = vld [vmem:[#allocation10 + $0x20] sm:$0xff]
        %v1005 = vld [vmem:[#allocation10 + $0x28] sm:$0xff]
        %v1006 = vld [vmem:[#allocation10 + $0x30] sm:$0xff]
        %v1007 = vld [vmem:[#allocation10 + $0x38] sm:$0xff]
        %v1008 = vld [vmem:[#allocation10 + $0x40] sm:$0xff]
        %v1009 = vld [vmem:[#allocation10 + $0x48] sm:$0xff]
        %v1010 = vld [vmem:[#allocation10 + $0x50] sm:$0xff]
        %v1011 = vld [vmem:[#allocation10 + $0x58] sm:$0xff]
        %v1012 = vld [vmem:[#allocation10 + $0x60] sm:$0xff]
        %v1013 = vld [vmem:[#allocation10 + $0x68] sm:$0xff]
        %v1014 = vld [vmem:[#allocation10 + $0x70] sm:$0xff]
        %v1015 = vld [vmem:[#allocation10 + $0x78] sm:$0xff]
        %v1016 = vld [vmem:[#allocation10 + $0x80] sm:$0xff]
        %v1017 = vld [vmem:[#allocation10 + $0x88] sm:$0xff]
        %v1018 = vld [vmem:[#allocation10 + $0x90] sm:$0xff]
        %v1019 = vld [vmem:[#allocation10 + $0x98] sm:$0xff]
        %v1020 = vld [vmem:[#allocation10 + $0xa0] sm:$0xff]
        %v1021 = vld [vmem:[#allocation10 + $0xa8] sm:$0xff]
        %v1022 = vld [vmem:[#allocation10 + $0xb0] sm:$0xff]
        %v1023 = vld [vmem:[#allocation10 + $0xb8] sm:$0xff]
        %v1024 = vld [vmem:[#allocation10 + $0xc0] sm:$0xff]
        %v1025 = vld [vmem:[#allocation10 + $0xc8] sm:$0xff]
        %v1026 = vld [vmem:[#allocation10 + $0xd0] sm:$0xff]
        %v1027 = vld [vmem:[#allocation10 + $0xd8] sm:$0xff]
        %v1028 = vld [vmem:[#allocation10 + $0xe0] sm:$0xff]
        %v1029 = vld [vmem:[#allocation10 + $0xe8] sm:$0xff]
        %v1030 = vld [vmem:[#allocation10 + $0xf0] sm:$0xff]
        %v1031 = vld [vmem:[#allocation10 + $0xf8] sm:$0xff]
        %v1032 = vld [vmem:[#allocation10 + $0x100] sm:$0xff]
        %v1033 = vld [vmem:[#allocation10 + $0x108] sm:$0xff]
        %v1034 = vld [vmem:[#allocation10 + $0x110] sm:$0xff]
        %v1035 = vld [vmem:[#allocation10 + $0x118] sm:$0xff]
        %v1036 = vld [vmem:[#allocation10 + $0x120] sm:$0xff]
        %v1037 = vld [vmem:[#allocation10 + $0x128] sm:$0xff]
        %v1038 = vld [vmem:[#allocation10 + $0x130] sm:$0xff]
        %v1039 = vld [vmem:[#allocation10 + $0x138] sm:$0xff]
        %v1040 = vld [vmem:[#allocation10 + $0x140] sm:$0xff]
        %v1041 = vld [vmem:[#allocation10 + $0x148] sm:$0xff]
        %v1042 = vld [vmem:[#allocation10 + $0x150] sm:$0xff]
        %v1043 = vld [vmem:[#allocation10 + $0x158] sm:$0xff]
        %v1044 = vld [vmem:[#allocation10 + $0x160] sm:$0xff]
        %v1045 = vld [vmem:[#allocation10 + $0x168] sm:$0xff]
        %v1046 = vld [vmem:[#allocation10 + $0x170] sm:$0xff]
        %v1047 = vld [vmem:[#allocation10 + $0x178] sm:$0xff]
        %v1048 = vld [vmem:[%s9] sm:$0x1]
        %v1050 = vperm.slane %v1048, 0
        %1052 = vmatpush.msra.mxu0 %v1015
        %1053 = vmatpush.msra.mxu0 %v1014
        %1054 = vmatpush.msra.mxu0 %v1013
        %1055 = vmatpush.msra.mxu0 %v1012
        %1056 = vmatpush.msra.mxu0 %v1011
        %1057 = vmatpush.msra.mxu0 %v1010
        %1058 = vmatpush.msra.mxu0 %v1009
        %1059 = vmatpush.msra.mxu0 %v1008
        %1060 = vmatpush.msra.mxu0 %v1007
        %1061 = vmatpush.msra.mxu0 %v1006
        %1062 = vmatpush.msra.mxu0 %v1005
        %1063 = vmatpush.msra.mxu0 %v1004
        %1064 = vmatpush.msra.mxu0 %v1003
        %1065 = vmatpush.msra.mxu0 %v1002
        %1066 = vmatpush.msra.mxu0 %v1001
        %1067 = vmatpush.msra.mxu0 %v1000
        %1068 = vmatmul.f32.gmra.mxu0 %v992
        %v1069 = vpop.f32.mrf.mxu0
        %v1070 = vadd.f32 %v1050, %v1069
        %1071 = vmatmul.f32.gmra.mxu0 %v993
        %v1072 = vpop.f32.mrf.mxu0
        %v1073 = vadd.f32 %v1050, %v1072
        %1074 = vdwg.mxu0
        %1075 = vmatpush.msra.mxu0 %v1031
        %1076 = vmatpush.msra.mxu0 %v1030
        %1077 = vmatpush.msra.mxu0 %v1029
        %1078 = vmatpush.msra.mxu0 %v1028
        %1079 = vmatpush.msra.mxu0 %v1027
        %1080 = vmatpush.msra.mxu0 %v1026
        %1081 = vmatpush.msra.mxu0 %v1025
        %1082 = vmatpush.msra.mxu0 %v1024
        %1083 = vmatpush.msra.mxu0 %v1023
        %1084 = vmatpush.msra.mxu0 %v1022
        %1085 = vmatpush.msra.mxu0 %v1021
        %1086 = vmatpush.msra.mxu0 %v1020
        %1087 = vmatpush.msra.mxu0 %v1019
        %1088 = vmatpush.msra.mxu0 %v1018
        %1089 = vmatpush.msra.mxu0 %v1017
        %1090 = vmatpush.msra.mxu0 %v1016
        %1091 = vmatmul.f32.gmra.mxu0 %v986
        %v1092 = vpop.f32.mrf.mxu0
        %v1093 = vadd.f32 %v1070, %v1092
        %1094 = vmatmul.f32.gmra.mxu0 %v987
        %v1095 = vpop.f32.mrf.mxu0
        %v1096 = vadd.f32 %v1073, %v1095
        %1097 = vdwg.mxu0
        %1098 = vmatpush.msra.mxu0 %v1047
        %1099 = vmatpush.msra.mxu0 %v1046
        %1100 = vmatpush.msra.mxu0 %v1045
        %1101 = vmatpush.msra.mxu0 %v1044
        %1102 = vmatpush.msra.mxu0 %v1043
        %1103 = vmatpush.msra.mxu0 %v1042
        %1104 = vmatpush.msra.mxu0 %v1041
        %1105 = vmatpush.msra.mxu0 %v1040
        %1106 = vmatpush.msra.mxu0 %v1039
        %1107 = vmatpush.msra.mxu0 %v1038
        %1108 = vmatpush.msra.mxu0 %v1037
        %1109 = vmatpush.msra.mxu0 %v1036
        %1110 = vmatpush.msra.mxu0 %v1035
        %1111 = vmatpush.msra.mxu0 %v1034
        %1112 = vmatpush.msra.mxu0 %v1033
        %1113 = vmatpush.msra.mxu0 %v1032
        %1114 = vmatmul.f32.gmra.mxu0 %v998
        %v1115 = vpop.f32.mrf.mxu0
        %v1116 = vadd.f32 %v1093, %v1115
        %1117 = vmatmul.f32.gmra.mxu0 %v999
        %v1118 = vpop.f32.mrf.mxu0
        %v1119 = vadd.f32 %v1096, %v1118
        %1120 = vdwg.mxu0
        %v1121 = vadd.f32 %v1116, %v849
        %v1122 = vadd.f32 %v1119, %v850
        %v1123 = vld [vmem:[#allocation11] sm:$0xff]
        %v1124 = vld [vmem:[#allocation11 + $0x8] sm:$0xff]
        %v1125 = vld [vmem:[#allocation11 + $0x10] sm:$0xff]
        %v1126 = vld [vmem:[#allocation11 + $0x18] sm:$0xff]
        %v1127 = vld [vmem:[#allocation11 + $0x20] sm:$0xff]
        %v1128 = vld [vmem:[#allocation11 + $0x28] sm:$0xff]
        %v1129 = vld [vmem:[#allocation11 + $0x30] sm:$0xff]
        %v1130 = vld [vmem:[#allocation11 + $0x38] sm:$0xff]
        %v1131 = vld [vmem:[#allocation11 + $0x40] sm:$0xff]
        %v1132 = vld [vmem:[#allocation11 + $0x48] sm:$0xff]
        %v1133 = vld [vmem:[#allocation11 + $0x50] sm:$0xff]
        %v1134 = vld [vmem:[#allocation11 + $0x58] sm:$0xff]
        %v1135 = vld [vmem:[#allocation11 + $0x60] sm:$0xff]
        %v1136 = vld [vmem:[#allocation11 + $0x68] sm:$0xff]
        %v1137 = vld [vmem:[#allocation11 + $0x70] sm:$0xff]
        %v1138 = vld [vmem:[#allocation11 + $0x78] sm:$0xff]
        %v1139 = vld [vmem:[#allocation11 + $0x80] sm:$0xff]
        %v1140 = vld [vmem:[#allocation11 + $0x88] sm:$0xff]
        %v1141 = vld [vmem:[#allocation11 + $0x90] sm:$0xff]
        %v1142 = vld [vmem:[#allocation11 + $0x98] sm:$0xff]
        %v1143 = vld [vmem:[#allocation11 + $0xa0] sm:$0xff]
        %v1144 = vld [vmem:[#allocation11 + $0xa8] sm:$0xff]
        %v1145 = vld [vmem:[#allocation11 + $0xb0] sm:$0xff]
        %v1146 = vld [vmem:[#allocation11 + $0xb8] sm:$0xff]
        %v1147 = vld [vmem:[#allocation11 + $0xc0] sm:$0xff]
        %v1148 = vld [vmem:[#allocation11 + $0xc8] sm:$0xff]
        %v1149 = vld [vmem:[#allocation11 + $0xd0] sm:$0xff]
        %v1150 = vld [vmem:[#allocation11 + $0xd8] sm:$0xff]
        %v1151 = vld [vmem:[#allocation11 + $0xe0] sm:$0xff]
        %v1152 = vld [vmem:[#allocation11 + $0xe8] sm:$0xff]
        %v1153 = vld [vmem:[#allocation11 + $0xf0] sm:$0xff]
        %v1154 = vld [vmem:[#allocation11 + $0xf8] sm:$0xff]
        %1155 = vmatpush.msra.mxu0 %v1153
        %1156 = vmatpush.msra.mxu0 %v1151
        %1157 = vmatpush.msra.mxu0 %v1149
        %1158 = vmatpush.msra.mxu0 %v1147
        %1159 = vmatpush.msra.mxu0 %v1145
        %1160 = vmatpush.msra.mxu0 %v1143
        %1161 = vmatpush.msra.mxu0 %v1141
        %1162 = vmatpush.msra.mxu0 %v1139
        %1163 = vmatpush.msra.mxu0 %v1137
        %1164 = vmatpush.msra.mxu0 %v1135
        %1165 = vmatpush.msra.mxu0 %v1133
        %1166 = vmatpush.msra.mxu0 %v1131
        %1167 = vmatpush.msra.mxu0 %v1129
        %1168 = vmatpush.msra.mxu0 %v1127
        %1169 = vmatpush.msra.mxu0 %v1125
        %1170 = vmatpush.msra.mxu0 %v1123
        %1171 = vmatmul.f32.gmra.mxu0 %v1121
        %v1172 = vpop.f32.mrf.mxu0
        %v1173 = vadd.f32 0.0, %v1172
        %1174 = vmatmul.f32.gmra.mxu0 %v1122
        %v1175 = vpop.f32.mrf.mxu0
        %v1176 = vadd.f32 0.0, %v1175
        %1177 = vdwg.mxu0
        %1178 = vmatpush.msra.mxu0 %v1154
        %1179 = vmatpush.msra.mxu0 %v1152
        %1180 = vmatpush.msra.mxu0 %v1150
        %1181 = vmatpush.msra.mxu0 %v1148
        %1182 = vmatpush.msra.mxu0 %v1146
        %1183 = vmatpush.msra.mxu0 %v1144
        %1184 = vmatpush.msra.mxu0 %v1142
        %1185 = vmatpush.msra.mxu0 %v1140
        %1186 = vmatpush.msra.mxu0 %v1138
        %1187 = vmatpush.msra.mxu0 %v1136
        %1188 = vmatpush.msra.mxu0 %v1134
        %1189 = vmatpush.msra.mxu0 %v1132
        %1190 = vmatpush.msra.mxu0 %v1130
        %1191 = vmatpush.msra.mxu0 %v1128
        %1192 = vmatpush.msra.mxu0 %v1126
        %1193 = vmatpush.msra.mxu0 %v1124
        %1194 = vmatmul.f32.gmra.mxu0 %v1121
        %v1195 = vpop.f32.mrf.mxu0
        %v1196 = vadd.f32 0.0, %v1195
        %1197 = vmatmul.f32.gmra.mxu0 %v1122
        %v1198 = vpop.f32.mrf.mxu0
        %v1199 = vadd.f32 0.0, %v1198
        %1200 = vdwg.mxu0
        %v1201 = vld [vmem:[%s12] sm:$0xff]
        %v1202 = vld [vmem:[%s12 + $0x8] sm:$0xff]
        %v1203 = vld [vmem:[%s12 + $0x10] sm:$0xff]
        %v1204 = vld [vmem:[%s12 + $0x18] sm:$0xff]
        %v1205 = vld [vmem:[%s11] sm:$0x3]
        %v1207 = vperm.slane %v1205, 0
        %v1208 = vperm.slane %v1205, 1
        %vm1211 = vcmask 130048
        %v1213 = vsel %vm1211, %v1201, 0
        %v1216 = vsel %vm1211, %v1202, 0
        %v1219 = vsel %vm1211, %v1203, 0
        %v1222 = vsel %vm1211, %v1204, 0
        %1224 = vmatpush.msra.mxu0 0.0
        %1225 = vmatpush.msra.mxu0 0.0
        %1226 = vmatpush.msra.mxu0 0.0
        %1227 = vmatpush.msra.mxu0 0.0
        %1228 = vmatpush.msra.mxu0 0.0
        %1229 = vmatpush.msra.mxu0 0.0
        %1230 = vmatpush.msra.mxu0 0.0
        %1231 = vmatpush.msra.mxu0 0.0
        %1232 = vmatpush.msra.mxu0 0.0
        %1233 = vmatpush.msra.mxu0 0.0
        %1234 = vmatpush.msra.mxu0 0.0
        %1235 = vmatpush.msra.mxu0 0.0
        %1236 = vmatpush.msra.mxu0 0.0
        %1237 = vmatpush.msra.mxu0 0.0
        %1238 = vmatpush.msra.mxu0 %v1176
        %1239 = vmatpush.msra.mxu0 %v1173
        %1240 = vmatmul.f32.gmra.mxu0 %v1213
        %v1241 = vpop.f32.mrf.mxu0
        %v1242 = vadd.f32 %v1207, %v1241
        %1243 = vmatmul.f32.gmra.mxu0 %v1216
        %v1244 = vpop.f32.mrf.mxu0
        %v1245 = vadd.f32 %v1207, %v1244
        %1246 = vmatmul.f32.gmra.mxu0 %v1219
        %v1247 = vpop.f32.mrf.mxu0
        %v1248 = vadd.f32 %v1207, %v1247
        %1249 = vmatmul.f32.gmra.mxu0 %v1222
        %v1250 = vpop.f32.mrf.mxu0
        %v1251 = vadd.f32 %v1207, %v1250
        %1252 = vdwg.mxu0
        %1253 = vmatpush.msra.mxu0 0.0
        %1254 = vmatpush.msra.mxu0 0.0
        %1255 = vmatpush.msra.mxu0 0.0
        %1256 = vmatpush.msra.mxu0 0.0
        %1257 = vmatpush.msra.mxu0 0.0
        %1258 = vmatpush.msra.mxu0 0.0
        %1259 = vmatpush.msra.mxu0 0.0
        %1260 = vmatpush.msra.mxu0 0.0
        %1261 = vmatpush.msra.mxu0 0.0
        %1262 = vmatpush.msra.mxu0 0.0
        %1263 = vmatpush.msra.mxu0 0.0
        %1264 = vmatpush.msra.mxu0 0.0
        %1265 = vmatpush.msra.mxu0 0.0
        %1266 = vmatpush.msra.mxu0 0.0
        %1267 = vmatpush.msra.mxu0 %v1199
        %1268 = vmatpush.msra.mxu0 %v1196
        %1269 = vmatmul.f32.gmra.mxu0 %v1213
        %v1270 = vpop.f32.mrf.mxu0
        %v1271 = vadd.f32 %v1208, %v1270
        %1272 = vmatmul.f32.gmra.mxu0 %v1216
        %v1273 = vpop.f32.mrf.mxu0
        %v1274 = vadd.f32 %v1208, %v1273
        %1275 = vmatmul.f32.gmra.mxu0 %v1219
        %v1276 = vpop.f32.mrf.mxu0
        %v1277 = vadd.f32 %v1208, %v1276
        %1278 = vmatmul.f32.gmra.mxu0 %v1222
        %v1279 = vpop.f32.mrf.mxu0
        %v1280 = vadd.f32 %v1208, %v1279
        %1281 = vdwg.mxu0
        %1282 = vst [vmem:[%s558] sm:$0xff] %v1242
        %1283 = vst [vmem:[%s558 + $0x8] sm:$0xff] %v1271
        %1284 = vst [vmem:[%s558 + $0x10] sm:$0xff] %v1245
        %1285 = vst [vmem:[%s558 + $0x18] sm:$0xff] %v1274
        %1286 = vst [vmem:[%s558 + $0x20] sm:$0xff] %v1248
        %1287 = vst [vmem:[%s558 + $0x28] sm:$0xff] %v1277
        %1288 = vst [vmem:[%s558 + $0x30] sm:$0xff] %v1251
        %1289 = vst [vmem:[%s558 + $0x38] sm:$0xff] %v1280
        %s1290 = sand.u32 %s324, 1
        %s1291 = scalar_lea.sflag [#allocation4], %s1290
        %s1292 = sand.u32 %s324, 1
        %s1293 = smul.addr %s1292, 64
        %s1294 = scalar_lea.vmem [#allocation13], %s1293
        // Predicated region
        $region97: #{tpu_custom_call.1} parent=71 // pred_check
          %p1295 = pneg %p334
        $region98: #{tpu_custom_call.1} parent=71 // pred_check_branch
          %1297 = sbr.rel (%p1295) target = $region100
        $region99: #{tpu_custom_call.1} parent=71 // pred_region
          %1299 = vsyncadd %s1291, 0
          %s1300 = smul.addr %s33, 8
          %s1301 = smul.addr %s1300, 8
          %s1302 = scalar_lea.hbm %s13, %s1301
          %s1303 = sshll.u32 %s1294, 4
          %s1304 = int_to_ptr.vmem [resolvable:$true] %s1303
          %s1305 = sshll.u32 %s1302, 4
          %s1306 = int_to_ptr.hbm [resolvable:$true] %s1305
          %1311 = dma.vmem_to_hbm [thread:$0]  %s1304, 1024, %s1306, %s1291, 256, 256, 16
        $region100: #{tpu_custom_call.1} parent=71 // pred_fallthru
          _
      $region72: #{tpu_custom_call.1} parent=5 // pred_fallthru
        _
      %p1312 = scmp.le.s32.totalorder 2, %s28
      // Predicated region
      $region101: #{tpu_custom_call.1} parent=5 // pred_check
        %p1313 = pneg %p1312
      $region102: #{tpu_custom_call.1} parent=5 // pred_check_branch
        %1315 = sbr.rel (%p1313) target = $region104
      $region103: #{tpu_custom_call.1} parent=5 // pred_region
        %s1316 = ssub.s32 %s28, 2
        // Predicated region
        $region105: #{tpu_custom_call.1} parent=103 // pred_check
          %p1317 = pneg %p340
        $region106: #{tpu_custom_call.1} parent=103 // pred_check_branch
          %1319 = sbr.rel (%p1317) target = $region108
        $region107: #{tpu_custom_call.1} parent=103 // pred_region
          %s1320 = sand.u32 %s325, 1
          %s1321 = scalar_lea.sflag [#allocation4], %s1320
          %s1322 = sand.u32 %s325, 1
          %s1323 = smul.addr %s1322, 64
          %s1324 = scalar_lea.vmem [#allocation13], %s1323
          %1326 = dma.done %s1321, 1024
        $region108: #{tpu_custom_call.1} parent=103 // pred_fallthru
          _
      $region104: #{tpu_custom_call.1} parent=5 // pred_fallthru
        _
    $region6: #{tpu_custom_call.1} parent=1 // loop_footer
      %s32 = sadd.s32 1, %s28
    $region7: #{tpu_custom_call.1} parent=1 // loop_footer_branch
      %27 = sbr.rel target = $region3
    $region8: #{tpu_custom_call.1} parent=1 // loop_exit
      _
    %1327 = vsyncpa [#allocation3], 1
    %s1328 = scalar_lea.sflag [#allocation3], 1
    %1329 = vsyncpa %s1328, 1
    %1330 = vsyncpa [#allocation6], 1
    %1331 = vsyncpa [#allocation9], 1
    %1332 = vsyncpa [#allocation12], 1
    %1333 = vsyncpa [#allocation4], 1
    %s1334 = scalar_lea.sflag [#allocation4], 1
    %1335 = vsyncpa %s1334, 1

</llo_original>
